<compile_context>
chip_gen: v6e
topology: v6e:2x2x1
jax: 0.10.0
libtpu: 0.0.40
codegen_flags: <defaults>
</compile_context>

<pallas_src>
import functools

import numpy as np

import jax
import jax.numpy as jnp
from jax.experimental import pallas as pl
from jax.experimental.pallas import tpu as pltpu

NEG_SLOPE = 0.01                       # PyTorch F.leaky_relu default
_CPAD = 8                              # all channel dims padded to 8 sublanes
_HIGHEST = jax.lax.Precision.HIGHEST   # used only in the XLA reference


# ---------------------------------------------------------------------------
# The fused kernel: whole autoencoder forward for ONE image per grid step.
# Activations live as (8, M) with the H*W pixel index on the lane axis.
# ---------------------------------------------------------------------------
def _cae_kernel(x_ref, w1_ref, b1_ref, w2_ref, b2_ref, w3_ref, b3_ref,
                w4_ref, b4_ref, md1_ref, md2_ref, pm_ref, out_ref, *, h, w):
    m = h * w                                     # pixels per image (lanes)

    def leaky(v):
        return jnp.maximum(v, NEG_SLOPE * v)      # single VALU max

    def shift(a, off):
        # shifted[:, i] = a[:, i + off]; wrap-around lanes are killed by the
        # precomputed boundary masks / parity selects of the callers.
        if off == 0:
            return a
        return pltpu.roll(a, (-off) % m, axis=1)

    def conv3x3(a, w_r, b_r, mask_r, dil):
        # im2col: 9 shifted copies stacked along sublanes -> one K=72 matmul.
        taps = []
        t = 0
        for dy in (-1, 0, 1):
            for dx in (-1, 0, 1):
                s = shift(a, dil * (dy * w + dx))
                if dy or dx:                       # centre tap: mask is all-1
                    s = s * mask_r[t:t + 1, :]     # zero-padding boundary mask
                taps.append(s)
                t += 1
        t72 = jnp.concatenate(taps, axis=0)        # (72, m)
        return jnp.dot(w_r[...], t72,
                       preferred_element_type=jnp.float32) + b_r[...]

    def block_pair_max(a, off, first):
        # Aligned-pair max along flat offset `off`. `first` is True on the
        # first element of each aligned pair (partner at +off), False on the
        # second (partner at -off). Result is constant on each aligned pair.
        partner = jnp.where(first, shift(a, off), shift(a, -off))
        return jnp.maximum(a, partner)

    col2 = pm_ref[0:1, :] != 0.0        # col % 2 == 0
    row2 = pm_ref[1:2, :] != 0.0        # row % 2 == 0
    col4 = pm_ref[2:3, :] != 0.0        # col % 4 < 2
    row4 = pm_ref[3:4, :] != 0.0        # row % 4 < 2

    x = x_ref[...]                                              # (8, m)
    a1 = leaky(conv3x3(x, w1_ref, b1_ref, md1_ref, 1))          # conv_1
    # pool_1: aligned 2x2 block max, broadcast over each block.
    p1 = block_pair_max(block_pair_max(a1, 1, col2), w, row2)
    a2 = leaky(conv3x3(p1, w2_ref, b2_ref, md2_ref, 2))         # conv_2 (dil 2)
    # pool_2 (+ the following nearest-x2 upsample): aligned 4x4 block max.
    p2 = block_pair_max(block_pair_max(a2, 1, col2), w, row2)
    p2 = block_pair_max(block_pair_max(p2, 2, col4), 2 * w, row4)
    a3 = leaky(conv3x3(p2, w3_ref, b3_ref, md2_ref, 2))         # conv_3 (dil 2)
    lg = leaky(conv3x3(a3, w4_ref, b4_ref, md1_ref, 1))         # conv_4
    logits = lg[0:1, :]                                         # real channel
    probas = pl.reciprocal(1.0 + jnp.exp(-logits), approx=True)
    out_ref[0:1, :] = logits
    out_ref[1:2, :] = probas


# ---------------------------------------------------------------------------
# Host-side constant preparation (weights, boundary / parity masks)
# ---------------------------------------------------------------------------
def _prep_conv(wt_oihw, b):
    """torch Conv2d (Cout,Cin,3,3)/(Cout,) -> (8, 72) im2col weight + (8,1)."""
    cout, cin = wt_oihw.shape[0], wt_oihw.shape[1]
    taps = jnp.transpose(wt_oihw, (0, 2, 3, 1))            # (cout, ky, kx, cin)
    taps = jnp.pad(taps, ((0, _CPAD - cout), (0, 0), (0, 0), (0, _CPAD - cin)))
    wmat = taps.reshape(_CPAD, 9 * _CPAD)                   # col = tap*8 + cin
    bias = jnp.pad(b, (0, _CPAD - cout)).reshape(_CPAD, 1)
    return wmat.astype(jnp.float32), bias.astype(jnp.float32)


def _tap_masks(h, w, dil):
    """(9, h*w) 0/1 masks: tap (dy,dx) valid (zero-padding) at dilation dil."""
    idx = np.arange(h * w)
    row, col = idx // w, idx % w
    masks = np.zeros((9, h * w), np.float32)
    t = 0
    for dy in (-1, 0, 1):
        for dx in (-1, 0, 1):
            ok = ((row + dil * dy >= 0) & (row + dil * dy < h) &
                  (col + dil * dx >= 0) & (col + dil * dx < w))
            masks[t] = ok.astype(np.float32)
            t += 1
    return jnp.asarray(masks)


def _pool_masks(h, w):
    """(4, h*w) parity masks: col%2==0, row%2==0, col%4<2, row%4<2."""
    idx = np.arange(h * w)
    row, col = idx // w, idx % w
    m = np.stack([(col % 2 == 0), (row % 2 == 0),
                  (col % 4 < 2), (row % 4 < 2)]).astype(np.float32)
    return jnp.asarray(m)


# ---------------------------------------------------------------------------
# Wrapper: layout prep + pallas_call (grid over batch, parallel semantics)
# ---------------------------------------------------------------------------
@jax.jit
def conv_autoencoder_forward(params, x_nchw):
    """Mirrors ConvolutionalAutoencoder.forward; x_nchw: (N, 1, H, W)."""
    n, cin, h, w = x_nchw.shape
    assert cin == 1, "module expects 1 input channel"
    assert h % 4 == 0 and w % 4 == 0, "two 2x2 pools need H, W divisible by 4"
    m = h * w
    assert m % 128 == 0, "lane-dense per-image blocks need H*W % 128 == 0"
    # TODO(synk): pad the per-image pixel axis to a multiple of 128 (with
    # masked pad lanes) to support e.g. 28x28 MNIST directly.

    x_flat = jnp.transpose(x_nchw, (1, 0, 2, 3)).reshape(cin, n * m)
    x_flat = jnp.pad(x_flat, ((0, _CPAD - cin), (0, 0))).astype(jnp.float32)

    w1, b1 = _prep_conv(*params["conv1"])
    w2, b2 = _prep_conv(*params["conv2"])
    w3, b3 = _prep_conv(*params["conv3"])
    w4, b4 = _prep_conv(*params["conv4"])

    md1 = _tap_masks(h, w, 1)          # conv_1 / conv_4 (dilation 1)
    md2 = _tap_masks(h, w, 2)          # conv_2 / conv_3 (dilation 2, a trous)
    pm = _pool_masks(h, w)             # pool parity masks

    def img_spec(rows):
        return pl.BlockSpec((rows, m), lambda i: (0, i))

    def const_spec(arr):
        return pl.BlockSpec(arr.shape, lambda i: (0, 0))

    in_specs = [img_spec(_CPAD),
                const_spec(w1), const_spec(b1), const_spec(w2), const_spec(b2),
                const_spec(w3), const_spec(b3), const_spec(w4), const_spec(b4),
                const_spec(md1), const_spec(md2), const_spec(pm)]

    const_bytes = 4 * (4 * (_CPAD * 9 * _CPAD + _CPAD) + (9 + 9 + 4) * m)
    flops = int(n * 4 * 2 * _CPAD * (9 * _CPAD) * m)       # 4 K=72 matmuls/img
    cost = pl.CostEstimate(
        flops=flops, transcendentals=int(n * m),
        bytes_accessed=int(4 * (_CPAD * n * m + 2 * n * m) + n * const_bytes))

    # VMEM budget computed from actual buffer sizes (double-buffered blocks +
    # live intermediates), generous headroom, independent of chip generation.
    block_bytes = 4 * (_CPAD * m + 2 * m) + const_bytes
    interm_bytes = 4 * (2 * 9 * _CPAD * m + 8 * _CPAD * m)
    vmem_limit = int(min(100 * 1024 * 1024,
                         max(8 * 1024 * 1024,
                             4 * (2 * block_bytes + interm_bytes))))

    kern = functools.partial(_cae_kernel, h=h, w=w)
    out = pl.pallas_call(
        kern,
        out_shape=jax.ShapeDtypeStruct((2, n * m), jnp.float32),
        grid=(n,),
        in_specs=in_specs,
        out_specs=img_spec(2),
        compiler_params=pltpu.CompilerParams(
            dimension_semantics=("parallel",),     # 2x on v7x (2 TC/chip)
            vmem_limit_bytes=vmem_limit),
        cost_estimate=cost,
    )(x_flat, w1, b1, w2, b2, w3, b3, w4, b4, md1, md2, pm)

    logits = out[0].reshape(n, h, w)[:, None, :, :]       # back to NCHW
    probas = out[1].reshape(n, h, w)[:, None, :, :]
    return logits, probas


# ---------------------------------------------------------------------------
# Deterministic parameters (torch.nn.Conv2d layout) and a pure-JAX reference
# ---------------------------------------------------------------------------
def init_params(key):
    def conv_init(k, cin, cout):
        k1, k2 = jax.random.split(k)
        bound = 1.0 / float(np.sqrt(cin * 9))
        wgt = jax.random.uniform(k1, (cout, cin, 3, 3), jnp.float32, -bound, bound)
        b = jax.random.uniform(k2, (cout,), jnp.float32, -bound, bound)
        return wgt, b

    k1, k2, k3, k4 = jax.random.split(key, 4)
    return {
        "conv1": conv_init(k1, 1, 4),
        "conv2": conv_init(k2, 4, 8),
        "conv3": conv_init(k3, 8, 4),
        "conv4": conv_init(k4, 4, 1),
    }


def _reference_forward(params, x):
    """Plain-JAX (XLA) reference of the PyTorch module, for self-checking."""
    def leaky(v):
        return jnp.where(v > 0, v, NEG_SLOPE * v)

    def conv(a, wgt, b):
        y = jax.lax.conv_general_dilated(
            a, wgt, window_strides=(1, 1), padding=((1, 1), (1, 1)),
            dimension_numbers=("NCHW", "OIHW", "NCHW"), precision=_HIGHEST)
        return y + b[None, :, None, None]

    def pool(a):
        return jax.lax.reduce_window(a, -jnp.inf, jax.lax.max,
                                     (1, 1, 2, 2), (1, 1, 2, 2), "VALID")

    def up(a):
        return jnp.repeat(jnp.repeat(a, 2, axis=2), 2, axis=3)

    a = leaky(conv(x, *params["conv1"]))
    a = pool(a)
    a = leaky(conv(a, *params["conv2"]))
    a = pool(a)
    a = up(a)
    a = leaky(conv(a, *params["conv3"]))
    a = up(a)
    logits = leaky(conv(a, *params["conv4"]))
    return logits, 1.0 / (1.0 + jnp.exp(-logits))


if __name__ == "__main__":
    key = jax.random.PRNGKey(0)
    kx, kp = jax.random.split(key)
    x = jax.random.normal(kx, (2, 1, 16, 16), dtype=jnp.float32)
    params = init_params(kp)

    logits, probas = conv_autoencoder_forward(params, x)
    jax.block_until_ready((logits, probas))

    assert logits.shape == (2, 1, 16, 16) and probas.shape == (2, 1, 16, 16)

    ref_logits, ref_probas = jax.jit(_reference_forward)(params, x)
    jax.block_until_ready((ref_logits, ref_probas))
    assert bool(jnp.allclose(logits, ref_logits, atol=3e-2, rtol=0.0))
    assert bool(jnp.allclose(probas, ref_probas, atol=3e-2, rtol=0.0))
    assert bool(jnp.all(jnp.isfinite(logits)))
    assert bool(jnp.all((probas >= 0.0) & (probas <= 1.0)))

    print("KERNEL_OK")
</pallas_src>

<mosaic_0001>
module attributes {stable_mosaic.version = 11 : i64} {
  func.func @_cae_kernel(%arg0: i32, %arg1: memref<8x256xf32, #tpu.memory_space<vmem>>, %arg2: memref<8x72xf32, #tpu.memory_space<vmem>>, %arg3: memref<8x1xf32, #tpu.memory_space<vmem>>, %arg4: memref<8x72xf32, #tpu.memory_space<vmem>>, %arg5: memref<8x1xf32, #tpu.memory_space<vmem>>, %arg6: memref<8x72xf32, #tpu.memory_space<vmem>>, %arg7: memref<8x1xf32, #tpu.memory_space<vmem>>, %arg8: memref<8x72xf32, #tpu.memory_space<vmem>>, %arg9: memref<8x1xf32, #tpu.memory_space<vmem>>, %arg10: memref<9x256xf32, #tpu.memory_space<vmem>>, %arg11: memref<9x256xf32, #tpu.memory_space<vmem>>, %arg12: memref<4x256xf32, #tpu.memory_space<vmem>>, %arg13: memref<2x256xf32, #tpu.memory_space<vmem>>) attributes {dimension_semantics = [#tpu.dimension_semantics<parallel>], iteration_bounds = array<i64: 2>, scalar_prefetch = 0 : i64, scratch_operands = 0 : i64, tpu.core_type = #tpu.core_type<tc>, window_params = [{transform_indices = @transform_0, window_bounds = array<i64: 8, 256>}, {pipeline_mode = #tpu.pipeline_mode<synchronous>, transform_indices = @transform_1, window_bounds = array<i64: 8, 72>}, {pipeline_mode = #tpu.pipeline_mode<synchronous>, transform_indices = @transform_2, window_bounds = array<i64: 8, 1>}, {pipeline_mode = #tpu.pipeline_mode<synchronous>, transform_indices = @transform_3, window_bounds = array<i64: 8, 72>}, {pipeline_mode = #tpu.pipeline_mode<synchronous>, transform_indices = @transform_4, window_bounds = array<i64: 8, 1>}, {pipeline_mode = #tpu.pipeline_mode<synchronous>, transform_indices = @transform_5, window_bounds = array<i64: 8, 72>}, {pipeline_mode = #tpu.pipeline_mode<synchronous>, transform_indices = @transform_6, window_bounds = array<i64: 8, 1>}, {pipeline_mode = #tpu.pipeline_mode<synchronous>, transform_indices = @transform_7, window_bounds = array<i64: 8, 72>}, {pipeline_mode = #tpu.pipeline_mode<synchronous>, transform_indices = @transform_8, window_bounds = array<i64: 8, 1>}, {pipeline_mode = #tpu.pipeline_mode<synchronous>, transform_indices = @transform_9, window_bounds = array<i64: 9, 256>}, {pipeline_mode = #tpu.pipeline_mode<synchronous>, transform_indices = @transform_10, window_bounds = array<i64: 9, 256>}, {pipeline_mode = #tpu.pipeline_mode<synchronous>, transform_indices = @transform_11, window_bounds = array<i64: 4, 256>}, {transform_indices = @transform_12, window_bounds = array<i64: 2, 256>}]} {
    %c0 = arith.constant 0 : index
    %c0_0 = arith.constant 0 : index
    %0 = vector.load %arg12[%c0, %c0_0] : memref<4x256xf32, #tpu.memory_space<vmem>>, vector<1x256xf32>
    %cst = arith.constant 0.000000e+00 : f32
    %1 = vector.broadcast %cst : f32 to vector<1x256xf32>
    %2 = arith.cmpf one, %0, %1 : vector<1x256xf32>
    %c1 = arith.constant 1 : index
    %c0_1 = arith.constant 0 : index
    %3 = vector.load %arg12[%c1, %c0_1] : memref<4x256xf32, #tpu.memory_space<vmem>>, vector<1x256xf32>
    %cst_2 = arith.constant 0.000000e+00 : f32
    %4 = vector.broadcast %cst_2 : f32 to vector<1x256xf32>
    %5 = arith.cmpf one, %3, %4 : vector<1x256xf32>
    %c2 = arith.constant 2 : index
    %c0_3 = arith.constant 0 : index
    %6 = vector.load %arg12[%c2, %c0_3] : memref<4x256xf32, #tpu.memory_space<vmem>>, vector<1x256xf32>
    %cst_4 = arith.constant 0.000000e+00 : f32
    %7 = vector.broadcast %cst_4 : f32 to vector<1x256xf32>
    %8 = arith.cmpf one, %6, %7 : vector<1x256xf32>
    %c3 = arith.constant 3 : index
    %c0_5 = arith.constant 0 : index
    %9 = vector.load %arg12[%c3, %c0_5] : memref<4x256xf32, #tpu.memory_space<vmem>>, vector<1x256xf32>
    %cst_6 = arith.constant 0.000000e+00 : f32
    %10 = vector.broadcast %cst_6 : f32 to vector<1x256xf32>
    %11 = arith.cmpf one, %9, %10 : vector<1x256xf32>
    %c0_7 = arith.constant 0 : index
    %c0_8 = arith.constant 0 : index
    %12 = vector.load %arg1[%c0_7, %c0_8] : memref<8x256xf32, #tpu.memory_space<vmem>>, vector<8x256xf32>
    %c17_i32 = arith.constant 17 : i32
    %13 = tpu.dynamic_rotate %12 by %c17_i32 dim 1 : vector<8x256xf32>, i32 -> vector<8x256xf32>
    %c0_9 = arith.constant 0 : index
    %c0_10 = arith.constant 0 : index
    %14 = vector.load %arg10[%c0_9, %c0_10] : memref<9x256xf32, #tpu.memory_space<vmem>>, vector<1x256xf32>
    %15 = vector.broadcast %14 : vector<1x256xf32> to vector<8x256xf32>
    %16 = arith.mulf %13, %15 : vector<8x256xf32>
    %c16_i32 = arith.constant 16 : i32
    %17 = tpu.dynamic_rotate %12 by %c16_i32 dim 1 : vector<8x256xf32>, i32 -> vector<8x256xf32>
    %c1_11 = arith.constant 1 : index
    %c0_12 = arith.constant 0 : index
    %18 = vector.load %arg10[%c1_11, %c0_12] : memref<9x256xf32, #tpu.memory_space<vmem>>, vector<1x256xf32>
    %19 = vector.broadcast %18 : vector<1x256xf32> to vector<8x256xf32>
    %20 = arith.mulf %17, %19 : vector<8x256xf32>
    %c15_i32 = arith.constant 15 : i32
    %21 = tpu.dynamic_rotate %12 by %c15_i32 dim 1 : vector<8x256xf32>, i32 -> vector<8x256xf32>
    %c2_13 = arith.constant 2 : index
    %c0_14 = arith.constant 0 : index
    %22 = vector.load %arg10[%c2_13, %c0_14] : memref<9x256xf32, #tpu.memory_space<vmem>>, vector<1x256xf32>
    %23 = vector.broadcast %22 : vector<1x256xf32> to vector<8x256xf32>
    %24 = arith.mulf %21, %23 : vector<8x256xf32>
    %c1_i32 = arith.constant 1 : i32
    %25 = tpu.dynamic_rotate %12 by %c1_i32 dim 1 : vector<8x256xf32>, i32 -> vector<8x256xf32>
    %c3_15 = arith.constant 3 : index
    %c0_16 = arith.constant 0 : index
    %26 = vector.load %arg10[%c3_15, %c0_16] : memref<9x256xf32, #tpu.memory_space<vmem>>, vector<1x256xf32>
    %27 = vector.broadcast %26 : vector<1x256xf32> to vector<8x256xf32>
    %28 = arith.mulf %25, %27 : vector<8x256xf32>
    %c255_i32 = arith.constant 255 : i32
    %29 = tpu.dynamic_rotate %12 by %c255_i32 dim 1 : vector<8x256xf32>, i32 -> vector<8x256xf32>
    %c5 = arith.constant 5 : index
    %c0_17 = arith.constant 0 : index
    %30 = vector.load %arg10[%c5, %c0_17] : memref<9x256xf32, #tpu.memory_space<vmem>>, vector<1x256xf32>
    %31 = vector.broadcast %30 : vector<1x256xf32> to vector<8x256xf32>
    %32 = arith.mulf %29, %31 : vector<8x256xf32>
    %c241_i32 = arith.constant 241 : i32
    %33 = tpu.dynamic_rotate %12 by %c241_i32 dim 1 : vector<8x256xf32>, i32 -> vector<8x256xf32>
    %c6 = arith.constant 6 : index
    %c0_18 = arith.constant 0 : index
    %34 = vector.load %arg10[%c6, %c0_18] : memref<9x256xf32, #tpu.memory_space<vmem>>, vector<1x256xf32>
    %35 = vector.broadcast %34 : vector<1x256xf32> to vector<8x256xf32>
    %36 = arith.mulf %33, %35 : vector<8x256xf32>
    %c240_i32 = arith.constant 240 : i32
    %37 = tpu.dynamic_rotate %12 by %c240_i32 dim 1 : vector<8x256xf32>, i32 -> vector<8x256xf32>
    %c7 = arith.constant 7 : index
    %c0_19 = arith.constant 0 : index
    %38 = vector.load %arg10[%c7, %c0_19] : memref<9x256xf32, #tpu.memory_space<vmem>>, vector<1x256xf32>
    %39 = vector.broadcast %38 : vector<1x256xf32> to vector<8x256xf32>
    %40 = arith.mulf %37, %39 : vector<8x256xf32>
    %c239_i32 = arith.constant 239 : i32
    %41 = tpu.dynamic_rotate %12 by %c239_i32 dim 1 : vector<8x256xf32>, i32 -> vector<8x256xf32>
    %c8 = arith.constant 8 : index
    %c0_20 = arith.constant 0 : index
    %42 = vector.load %arg10[%c8, %c0_20] : memref<9x256xf32, #tpu.memory_space<vmem>>, vector<1x256xf32>
    %43 = vector.broadcast %42 : vector<1x256xf32> to vector<8x256xf32>
    %44 = arith.mulf %41, %43 : vector<8x256xf32>
    %45 = tpu.concatenate %16, %20, %24, %28, %12, %32, %36, %40, %44 in 0 : vector<8x256xf32>, vector<8x256xf32>, vector<8x256xf32>, vector<8x256xf32>, vector<8x256xf32>, vector<8x256xf32>, vector<8x256xf32>, vector<8x256xf32>, vector<8x256xf32> -> vector<72x256xf32>
    %c0_21 = arith.constant 0 : index
    %c0_22 = arith.constant 0 : index
    %46 = vector.load %arg2[%c0_21, %c0_22] : memref<8x72xf32, #tpu.memory_space<vmem>>, vector<8x72xf32>
    %cst_23 = arith.constant dense<0.000000e+00> : vector<8x256xf32>
    %47 = tpu.matmul %46, %45, %cst_23 {dimension_numbers = #tpu.dot_dimension_numbers<[1], [0], [0], [1], [0, 0, 1, 1], [], []>} : vector<8x72xf32>, vector<72x256xf32>, vector<8x256xf32> -> vector<8x256xf32>
    %c0_24 = arith.constant 0 : index
    %c0_25 = arith.constant 0 : index
    %48 = vector.load %arg3[%c0_24, %c0_25] : memref<8x1xf32, #tpu.memory_space<vmem>>, vector<8x1xf32>
    %49 = vector.broadcast %48 : vector<8x1xf32> to vector<8x256xf32>
    %50 = arith.addf %47, %49 : vector<8x256xf32>
    %cst_26 = arith.constant 0.00999999977 : f32
    %51 = vector.broadcast %cst_26 : f32 to vector<8x256xf32>
    %52 = arith.mulf %51, %50 : vector<8x256xf32>
    %53 = arith.maximumf %50, %52 : vector<8x256xf32>
    %c255_i32_27 = arith.constant 255 : i32
    %54 = tpu.dynamic_rotate %53 by %c255_i32_27 dim 1 : vector<8x256xf32>, i32 -> vector<8x256xf32>
    %c1_i32_28 = arith.constant 1 : i32
    %55 = tpu.dynamic_rotate %53 by %c1_i32_28 dim 1 : vector<8x256xf32>, i32 -> vector<8x256xf32>
    %56 = vector.shape_cast %2 : vector<1x256xi1> to vector<1x256xi1>
    %57 = vector.broadcast %56 : vector<1x256xi1> to vector<8x256xi1>
    %58 = arith.select %57, %54, %55 : vector<8x256xi1>, vector<8x256xf32>
    %59 = arith.maximumf %53, %58 : vector<8x256xf32>
    %c240_i32_29 = arith.constant 240 : i32
    %60 = tpu.dynamic_rotate %59 by %c240_i32_29 dim 1 : vector<8x256xf32>, i32 -> vector<8x256xf32>
    %c16_i32_30 = arith.constant 16 : i32
    %61 = tpu.dynamic_rotate %59 by %c16_i32_30 dim 1 : vector<8x256xf32>, i32 -> vector<8x256xf32>
    %62 = vector.shape_cast %5 : vector<1x256xi1> to vector<1x256xi1>
    %63 = vector.broadcast %62 : vector<1x256xi1> to vector<8x256xi1>
    %64 = arith.select %63, %60, %61 : vector<8x256xi1>, vector<8x256xf32>
    %65 = arith.maximumf %59, %64 : vector<8x256xf32>
    %c34_i32 = arith.constant 34 : i32
    %66 = tpu.dynamic_rotate %65 by %c34_i32 dim 1 : vector<8x256xf32>, i32 -> vector<8x256xf32>
    %c0_31 = arith.constant 0 : index
    %c0_32 = arith.constant 0 : index
    %67 = vector.load %arg11[%c0_31, %c0_32] : memref<9x256xf32, #tpu.memory_space<vmem>>, vector<1x256xf32>
    %68 = vector.broadcast %67 : vector<1x256xf32> to vector<8x256xf32>
    %69 = arith.mulf %66, %68 : vector<8x256xf32>
    %c32_i32 = arith.constant 32 : i32
    %70 = tpu.dynamic_rotate %65 by %c32_i32 dim 1 : vector<8x256xf32>, i32 -> vector<8x256xf32>
    %c1_33 = arith.constant 1 : index
    %c0_34 = arith.constant 0 : index
    %71 = vector.load %arg11[%c1_33, %c0_34] : memref<9x256xf32, #tpu.memory_space<vmem>>, vector<1x256xf32>
    %72 = vector.broadcast %71 : vector<1x256xf32> to vector<8x256xf32>
    %73 = arith.mulf %70, %72 : vector<8x256xf32>
    %c30_i32 = arith.constant 30 : i32
    %74 = tpu.dynamic_rotate %65 by %c30_i32 dim 1 : vector<8x256xf32>, i32 -> vector<8x256xf32>
    %c2_35 = arith.constant 2 : index
    %c0_36 = arith.constant 0 : index
    %75 = vector.load %arg11[%c2_35, %c0_36] : memref<9x256xf32, #tpu.memory_space<vmem>>, vector<1x256xf32>
    %76 = vector.broadcast %75 : vector<1x256xf32> to vector<8x256xf32>
    %77 = arith.mulf %74, %76 : vector<8x256xf32>
    %c2_i32 = arith.constant 2 : i32
    %78 = tpu.dynamic_rotate %65 by %c2_i32 dim 1 : vector<8x256xf32>, i32 -> vector<8x256xf32>
    %c3_37 = arith.constant 3 : index
    %c0_38 = arith.constant 0 : index
    %79 = vector.load %arg11[%c3_37, %c0_38] : memref<9x256xf32, #tpu.memory_space<vmem>>, vector<1x256xf32>
    %80 = vector.broadcast %79 : vector<1x256xf32> to vector<8x256xf32>
    %81 = arith.mulf %78, %80 : vector<8x256xf32>
    %c254_i32 = arith.constant 254 : i32
    %82 = tpu.dynamic_rotate %65 by %c254_i32 dim 1 : vector<8x256xf32>, i32 -> vector<8x256xf32>
    %c5_39 = arith.constant 5 : index
    %c0_40 = arith.constant 0 : index
    %83 = vector.load %arg11[%c5_39, %c0_40] : memref<9x256xf32, #tpu.memory_space<vmem>>, vector<1x256xf32>
    %84 = vector.broadcast %83 : vector<1x256xf32> to vector<8x256xf32>
    %85 = arith.mulf %82, %84 : vector<8x256xf32>
    %c226_i32 = arith.constant 226 : i32
    %86 = tpu.dynamic_rotate %65 by %c226_i32 dim 1 : vector<8x256xf32>, i32 -> vector<8x256xf32>
    %c6_41 = arith.constant 6 : index
    %c0_42 = arith.constant 0 : index
    %87 = vector.load %arg11[%c6_41, %c0_42] : memref<9x256xf32, #tpu.memory_space<vmem>>, vector<1x256xf32>
    %88 = vector.broadcast %87 : vector<1x256xf32> to vector<8x256xf32>
    %89 = arith.mulf %86, %88 : vector<8x256xf32>
    %c224_i32 = arith.constant 224 : i32
    %90 = tpu.dynamic_rotate %65 by %c224_i32 dim 1 : vector<8x256xf32>, i32 -> vector<8x256xf32>
    %c7_43 = arith.constant 7 : index
    %c0_44 = arith.constant 0 : index
    %91 = vector.load %arg11[%c7_43, %c0_44] : memref<9x256xf32, #tpu.memory_space<vmem>>, vector<1x256xf32>
    %92 = vector.broadcast %91 : vector<1x256xf32> to vector<8x256xf32>
    %93 = arith.mulf %90, %92 : vector<8x256xf32>
    %c222_i32 = arith.constant 222 : i32
    %94 = tpu.dynamic_rotate %65 by %c222_i32 dim 1 : vector<8x256xf32>, i32 -> vector<8x256xf32>
    %c8_45 = arith.constant 8 : index
    %c0_46 = arith.constant 0 : index
    %95 = vector.load %arg11[%c8_45, %c0_46] : memref<9x256xf32, #tpu.memory_space<vmem>>, vector<1x256xf32>
    %96 = vector.broadcast %95 : vector<1x256xf32> to vector<8x256xf32>
    %97 = arith.mulf %94, %96 : vector<8x256xf32>
    %98 = tpu.concatenate %69, %73, %77, %81, %65, %85, %89, %93, %97 in 0 : vector<8x256xf32>, vector<8x256xf32>, vector<8x256xf32>, vector<8x256xf32>, vector<8x256xf32>, vector<8x256xf32>, vector<8x256xf32>, vector<8x256xf32>, vector<8x256xf32> -> vector<72x256xf32>
    %c0_47 = arith.constant 0 : index
    %c0_48 = arith.constant 0 : index
    %99 = vector.load %arg4[%c0_47, %c0_48] : memref<8x72xf32, #tpu.memory_space<vmem>>, vector<8x72xf32>
    %cst_49 = arith.constant dense<0.000000e+00> : vector<8x256xf32>
    %100 = tpu.matmul %99, %98, %cst_49 {dimension_numbers = #tpu.dot_dimension_numbers<[1], [0], [0], [1], [0, 0, 1, 1], [], []>} : vector<8x72xf32>, vector<72x256xf32>, vector<8x256xf32> -> vector<8x256xf32>
    %c0_50 = arith.constant 0 : index
    %c0_51 = arith.constant 0 : index
    %101 = vector.load %arg5[%c0_50, %c0_51] : memref<8x1xf32, #tpu.memory_space<vmem>>, vector<8x1xf32>
    %102 = vector.broadcast %101 : vector<8x1xf32> to vector<8x256xf32>
    %103 = arith.addf %100, %102 : vector<8x256xf32>
    %cst_52 = arith.constant 0.00999999977 : f32
    %104 = vector.broadcast %cst_52 : f32 to vector<8x256xf32>
    %105 = arith.mulf %104, %103 : vector<8x256xf32>
    %106 = arith.maximumf %103, %105 : vector<8x256xf32>
    %c255_i32_53 = arith.constant 255 : i32
    %107 = tpu.dynamic_rotate %106 by %c255_i32_53 dim 1 : vector<8x256xf32>, i32 -> vector<8x256xf32>
    %c1_i32_54 = arith.constant 1 : i32
    %108 = tpu.dynamic_rotate %106 by %c1_i32_54 dim 1 : vector<8x256xf32>, i32 -> vector<8x256xf32>
    %109 = vector.shape_cast %2 : vector<1x256xi1> to vector<1x256xi1>
    %110 = vector.broadcast %109 : vector<1x256xi1> to vector<8x256xi1>
    %111 = arith.select %110, %107, %108 : vector<8x256xi1>, vector<8x256xf32>
    %112 = arith.maximumf %106, %111 : vector<8x256xf32>
    %c240_i32_55 = arith.constant 240 : i32
    %113 = tpu.dynamic_rotate %112 by %c240_i32_55 dim 1 : vector<8x256xf32>, i32 -> vector<8x256xf32>
    %c16_i32_56 = arith.constant 16 : i32
    %114 = tpu.dynamic_rotate %112 by %c16_i32_56 dim 1 : vector<8x256xf32>, i32 -> vector<8x256xf32>
    %115 = vector.shape_cast %5 : vector<1x256xi1> to vector<1x256xi1>
    %116 = vector.broadcast %115 : vector<1x256xi1> to vector<8x256xi1>
    %117 = arith.select %116, %113, %114 : vector<8x256xi1>, vector<8x256xf32>
    %118 = arith.maximumf %112, %117 : vector<8x256xf32>
    %c254_i32_57 = arith.constant 254 : i32
    %119 = tpu.dynamic_rotate %118 by %c254_i32_57 dim 1 : vector<8x256xf32>, i32 -> vector<8x256xf32>
    %c2_i32_58 = arith.constant 2 : i32
    %120 = tpu.dynamic_rotate %118 by %c2_i32_58 dim 1 : vector<8x256xf32>, i32 -> vector<8x256xf32>
    %121 = vector.shape_cast %8 : vector<1x256xi1> to vector<1x256xi1>
    %122 = vector.broadcast %121 : vector<1x256xi1> to vector<8x256xi1>
    %123 = arith.select %122, %119, %120 : vector<8x256xi1>, vector<8x256xf32>
    %124 = arith.maximumf %118, %123 : vector<8x256xf32>
    %c224_i32_59 = arith.constant 224 : i32
    %125 = tpu.dynamic_rotate %124 by %c224_i32_59 dim 1 : vector<8x256xf32>, i32 -> vector<8x256xf32>
    %c32_i32_60 = arith.constant 32 : i32
    %126 = tpu.dynamic_rotate %124 by %c32_i32_60 dim 1 : vector<8x256xf32>, i32 -> vector<8x256xf32>
    %127 = vector.shape_cast %11 : vector<1x256xi1> to vector<1x256xi1>
    %128 = vector.broadcast %127 : vector<1x256xi1> to vector<8x256xi1>
    %129 = arith.select %128, %125, %126 : vector<8x256xi1>, vector<8x256xf32>
    %130 = arith.maximumf %124, %129 : vector<8x256xf32>
    %c34_i32_61 = arith.constant 34 : i32
    %131 = tpu.dynamic_rotate %130 by %c34_i32_61 dim 1 : vector<8x256xf32>, i32 -> vector<8x256xf32>
    %c0_62 = arith.constant 0 : index
    %c0_63 = arith.constant 0 : index
    %132 = vector.load %arg11[%c0_62, %c0_63] : memref<9x256xf32, #tpu.memory_space<vmem>>, vector<1x256xf32>
    %133 = vector.broadcast %132 : vector<1x256xf32> to vector<8x256xf32>
    %134 = arith.mulf %131, %133 : vector<8x256xf32>
    %c32_i32_64 = arith.constant 32 : i32
    %135 = tpu.dynamic_rotate %130 by %c32_i32_64 dim 1 : vector<8x256xf32>, i32 -> vector<8x256xf32>
    %c1_65 = arith.constant 1 : index
    %c0_66 = arith.constant 0 : index
    %136 = vector.load %arg11[%c1_65, %c0_66] : memref<9x256xf32, #tpu.memory_space<vmem>>, vector<1x256xf32>
    %137 = vector.broadcast %136 : vector<1x256xf32> to vector<8x256xf32>
    %138 = arith.mulf %135, %137 : vector<8x256xf32>
    %c30_i32_67 = arith.constant 30 : i32
    %139 = tpu.dynamic_rotate %130 by %c30_i32_67 dim 1 : vector<8x256xf32>, i32 -> vector<8x256xf32>
    %c2_68 = arith.constant 2 : index
    %c0_69 = arith.constant 0 : index
    %140 = vector.load %arg11[%c2_68, %c0_69] : memref<9x256xf32, #tpu.memory_space<vmem>>, vector<1x256xf32>
    %141 = vector.broadcast %140 : vector<1x256xf32> to vector<8x256xf32>
    %142 = arith.mulf %139, %141 : vector<8x256xf32>
    %c2_i32_70 = arith.constant 2 : i32
    %143 = tpu.dynamic_rotate %130 by %c2_i32_70 dim 1 : vector<8x256xf32>, i32 -> vector<8x256xf32>
    %c3_71 = arith.constant 3 : index
    %c0_72 = arith.constant 0 : index
    %144 = vector.load %arg11[%c3_71, %c0_72] : memref<9x256xf32, #tpu.memory_space<vmem>>, vector<1x256xf32>
    %145 = vector.broadcast %144 : vector<1x256xf32> to vector<8x256xf32>
    %146 = arith.mulf %143, %145 : vector<8x256xf32>
    %c254_i32_73 = arith.constant 254 : i32
    %147 = tpu.dynamic_rotate %130 by %c254_i32_73 dim 1 : vector<8x256xf32>, i32 -> vector<8x256xf32>
    %c5_74 = arith.constant 5 : index
    %c0_75 = arith.constant 0 : index
    %148 = vector.load %arg11[%c5_74, %c0_75] : memref<9x256xf32, #tpu.memory_space<vmem>>, vector<1x256xf32>
    %149 = vector.broadcast %148 : vector<1x256xf32> to vector<8x256xf32>
    %150 = arith.mulf %147, %149 : vector<8x256xf32>
    %c226_i32_76 = arith.constant 226 : i32
    %151 = tpu.dynamic_rotate %130 by %c226_i32_76 dim 1 : vector<8x256xf32>, i32 -> vector<8x256xf32>
    %c6_77 = arith.constant 6 : index
    %c0_78 = arith.constant 0 : index
    %152 = vector.load %arg11[%c6_77, %c0_78] : memref<9x256xf32, #tpu.memory_space<vmem>>, vector<1x256xf32>
    %153 = vector.broadcast %152 : vector<1x256xf32> to vector<8x256xf32>
    %154 = arith.mulf %151, %153 : vector<8x256xf32>
    %c224_i32_79 = arith.constant 224 : i32
    %155 = tpu.dynamic_rotate %130 by %c224_i32_79 dim 1 : vector<8x256xf32>, i32 -> vector<8x256xf32>
    %c7_80 = arith.constant 7 : index
    %c0_81 = arith.constant 0 : index
    %156 = vector.load %arg11[%c7_80, %c0_81] : memref<9x256xf32, #tpu.memory_space<vmem>>, vector<1x256xf32>
    %157 = vector.broadcast %156 : vector<1x256xf32> to vector<8x256xf32>
    %158 = arith.mulf %155, %157 : vector<8x256xf32>
    %c222_i32_82 = arith.constant 222 : i32
    %159 = tpu.dynamic_rotate %130 by %c222_i32_82 dim 1 : vector<8x256xf32>, i32 -> vector<8x256xf32>
    %c8_83 = arith.constant 8 : index
    %c0_84 = arith.constant 0 : index
    %160 = vector.load %arg11[%c8_83, %c0_84] : memref<9x256xf32, #tpu.memory_space<vmem>>, vector<1x256xf32>
    %161 = vector.broadcast %160 : vector<1x256xf32> to vector<8x256xf32>
    %162 = arith.mulf %159, %161 : vector<8x256xf32>
    %163 = tpu.concatenate %134, %138, %142, %146, %130, %150, %154, %158, %162 in 0 : vector<8x256xf32>, vector<8x256xf32>, vector<8x256xf32>, vector<8x256xf32>, vector<8x256xf32>, vector<8x256xf32>, vector<8x256xf32>, vector<8x256xf32>, vector<8x256xf32> -> vector<72x256xf32>
    %c0_85 = arith.constant 0 : index
    %c0_86 = arith.constant 0 : index
    %164 = vector.load %arg6[%c0_85, %c0_86] : memref<8x72xf32, #tpu.memory_space<vmem>>, vector<8x72xf32>
    %cst_87 = arith.constant dense<0.000000e+00> : vector<8x256xf32>
    %165 = tpu.matmul %164, %163, %cst_87 {dimension_numbers = #tpu.dot_dimension_numbers<[1], [0], [0], [1], [0, 0, 1, 1], [], []>} : vector<8x72xf32>, vector<72x256xf32>, vector<8x256xf32> -> vector<8x256xf32>
    %c0_88 = arith.constant 0 : index
    %c0_89 = arith.constant 0 : index
    %166 = vector.load %arg7[%c0_88, %c0_89] : memref<8x1xf32, #tpu.memory_space<vmem>>, vector<8x1xf32>
    %167 = vector.broadcast %166 : vector<8x1xf32> to vector<8x256xf32>
    %168 = arith.addf %165, %167 : vector<8x256xf32>
    %cst_90 = arith.constant 0.00999999977 : f32
    %169 = vector.broadcast %cst_90 : f32 to vector<8x256xf32>
    %170 = arith.mulf %169, %168 : vector<8x256xf32>
    %171 = arith.maximumf %168, %170 : vector<8x256xf32>
    %c17_i32_91 = arith.constant 17 : i32
    %172 = tpu.dynamic_rotate %171 by %c17_i32_91 dim 1 : vector<8x256xf32>, i32 -> vector<8x256xf32>
    %c0_92 = arith.constant 0 : index
    %c0_93 = arith.constant 0 : index
    %173 = vector.load %arg10[%c0_92, %c0_93] : memref<9x256xf32, #tpu.memory_space<vmem>>, vector<1x256xf32>
    %174 = vector.broadcast %173 : vector<1x256xf32> to vector<8x256xf32>
    %175 = arith.mulf %172, %174 : vector<8x256xf32>
    %c16_i32_94 = arith.constant 16 : i32
    %176 = tpu.dynamic_rotate %171 by %c16_i32_94 dim 1 : vector<8x256xf32>, i32 -> vector<8x256xf32>
    %c1_95 = arith.constant 1 : index
    %c0_96 = arith.constant 0 : index
    %177 = vector.load %arg10[%c1_95, %c0_96] : memref<9x256xf32, #tpu.memory_space<vmem>>, vector<1x256xf32>
    %178 = vector.broadcast %177 : vector<1x256xf32> to vector<8x256xf32>
    %179 = arith.mulf %176, %178 : vector<8x256xf32>
    %c15_i32_97 = arith.constant 15 : i32
    %180 = tpu.dynamic_rotate %171 by %c15_i32_97 dim 1 : vector<8x256xf32>, i32 -> vector<8x256xf32>
    %c2_98 = arith.constant 2 : index
    %c0_99 = arith.constant 0 : index
    %181 = vector.load %arg10[%c2_98, %c0_99] : memref<9x256xf32, #tpu.memory_space<vmem>>, vector<1x256xf32>
    %182 = vector.broadcast %181 : vector<1x256xf32> to vector<8x256xf32>
    %183 = arith.mulf %180, %182 : vector<8x256xf32>
    %c1_i32_100 = arith.constant 1 : i32
    %184 = tpu.dynamic_rotate %171 by %c1_i32_100 dim 1 : vector<8x256xf32>, i32 -> vector<8x256xf32>
    %c3_101 = arith.constant 3 : index
    %c0_102 = arith.constant 0 : index
    %185 = vector.load %arg10[%c3_101, %c0_102] : memref<9x256xf32, #tpu.memory_space<vmem>>, vector<1x256xf32>
    %186 = vector.broadcast %185 : vector<1x256xf32> to vector<8x256xf32>
    %187 = arith.mulf %184, %186 : vector<8x256xf32>
    %c255_i32_103 = arith.constant 255 : i32
    %188 = tpu.dynamic_rotate %171 by %c255_i32_103 dim 1 : vector<8x256xf32>, i32 -> vector<8x256xf32>
    %c5_104 = arith.constant 5 : index
    %c0_105 = arith.constant 0 : index
    %189 = vector.load %arg10[%c5_104, %c0_105] : memref<9x256xf32, #tpu.memory_space<vmem>>, vector<1x256xf32>
    %190 = vector.broadcast %189 : vector<1x256xf32> to vector<8x256xf32>
    %191 = arith.mulf %188, %190 : vector<8x256xf32>
    %c241_i32_106 = arith.constant 241 : i32
    %192 = tpu.dynamic_rotate %171 by %c241_i32_106 dim 1 : vector<8x256xf32>, i32 -> vector<8x256xf32>
    %c6_107 = arith.constant 6 : index
    %c0_108 = arith.constant 0 : index
    %193 = vector.load %arg10[%c6_107, %c0_108] : memref<9x256xf32, #tpu.memory_space<vmem>>, vector<1x256xf32>
    %194 = vector.broadcast %193 : vector<1x256xf32> to vector<8x256xf32>
    %195 = arith.mulf %192, %194 : vector<8x256xf32>
    %c240_i32_109 = arith.constant 240 : i32
    %196 = tpu.dynamic_rotate %171 by %c240_i32_109 dim 1 : vector<8x256xf32>, i32 -> vector<8x256xf32>
    %c7_110 = arith.constant 7 : index
    %c0_111 = arith.constant 0 : index
    %197 = vector.load %arg10[%c7_110, %c0_111] : memref<9x256xf32, #tpu.memory_space<vmem>>, vector<1x256xf32>
    %198 = vector.broadcast %197 : vector<1x256xf32> to vector<8x256xf32>
    %199 = arith.mulf %196, %198 : vector<8x256xf32>
    %c239_i32_112 = arith.constant 239 : i32
    %200 = tpu.dynamic_rotate %171 by %c239_i32_112 dim 1 : vector<8x256xf32>, i32 -> vector<8x256xf32>
    %c8_113 = arith.constant 8 : index
    %c0_114 = arith.constant 0 : index
    %201 = vector.load %arg10[%c8_113, %c0_114] : memref<9x256xf32, #tpu.memory_space<vmem>>, vector<1x256xf32>
    %202 = vector.broadcast %201 : vector<1x256xf32> to vector<8x256xf32>
    %203 = arith.mulf %200, %202 : vector<8x256xf32>
    %204 = tpu.concatenate %175, %179, %183, %187, %171, %191, %195, %199, %203 in 0 : vector<8x256xf32>, vector<8x256xf32>, vector<8x256xf32>, vector<8x256xf32>, vector<8x256xf32>, vector<8x256xf32>, vector<8x256xf32>, vector<8x256xf32>, vector<8x256xf32> -> vector<72x256xf32>
    %c0_115 = arith.constant 0 : index
    %c0_116 = arith.constant 0 : index
    %205 = vector.load %arg8[%c0_115, %c0_116] : memref<8x72xf32, #tpu.memory_space<vmem>>, vector<8x72xf32>
    %cst_117 = arith.constant dense<0.000000e+00> : vector<8x256xf32>
    %206 = tpu.matmul %205, %204, %cst_117 {dimension_numbers = #tpu.dot_dimension_numbers<[1], [0], [0], [1], [0, 0, 1, 1], [], []>} : vector<8x72xf32>, vector<72x256xf32>, vector<8x256xf32> -> vector<8x256xf32>
    %c0_118 = arith.constant 0 : index
    %c0_119 = arith.constant 0 : index
    %207 = vector.load %arg9[%c0_118, %c0_119] : memref<8x1xf32, #tpu.memory_space<vmem>>, vector<8x1xf32>
    %208 = vector.broadcast %207 : vector<8x1xf32> to vector<8x256xf32>
    %209 = arith.addf %206, %208 : vector<8x256xf32>
    %cst_120 = arith.constant 0.00999999977 : f32
    %210 = vector.broadcast %cst_120 : f32 to vector<8x256xf32>
    %211 = arith.mulf %210, %209 : vector<8x256xf32>
    %212 = arith.maximumf %209, %211 : vector<8x256xf32>
    %213 = vector.extract_strided_slice %212 {offsets = [0, 0], sizes = [1, 256], strides = [1, 1]} : vector<8x256xf32> to vector<1x256xf32>
    %cst_121 = arith.constant 0.000000e+00 : f32
    %214 = vector.broadcast %cst_121 : f32 to vector<1x256xf32>
    %215 = arith.subf %214, %213 : vector<1x256xf32>
    %216 = math.exp %215 : vector<1x256xf32>
    %cst_122 = arith.constant 1.000000e+00 : f32
    %217 = vector.broadcast %cst_122 : f32 to vector<1x256xf32>
    %218 = arith.addf %217, %216 : vector<1x256xf32>
    %219 = tpu.reciprocal %218 {approx = true} : vector<1x256xf32> -> vector<1x256xf32>
    %c0_123 = arith.constant 0 : index
    %c0_124 = arith.constant 0 : index
    %220 = vector.load %arg13[%c0_123, %c0_124] : memref<2x256xf32, #tpu.memory_space<vmem>>, vector<1x256xf32>
    tpu.vector_store %arg13[%c0_123, %c0_124], %213 {strides = array<i32>} : memref<2x256xf32, #tpu.memory_space<vmem>>, vector<1x256xf32>,
    %c1_125 = arith.constant 1 : index
    %c0_126 = arith.constant 0 : index
    %221 = vector.load %arg13[%c1_125, %c0_126] : memref<2x256xf32, #tpu.memory_space<vmem>>, vector<1x256xf32>
    tpu.vector_store %arg13[%c1_125, %c0_126], %219 {strides = array<i32>} : memref<2x256xf32, #tpu.memory_space<vmem>>, vector<1x256xf32>,
    return
  }
  func.func @transform_0(%arg0: i32) -> (i32, i32) {
    %c0_i32 = arith.constant 0 : i32
    %c0_i32_0 = arith.constant 0 : i32
    return %c0_i32, %arg0 : i32, i32
  }
  func.func @transform_1(%arg0: i32) -> (i32, i32) {
    %c0_i32 = arith.constant 0 : i32
    %c0_i32_0 = arith.constant 0 : i32
    %c0_i32_1 = arith.constant 0 : i32
    return %c0_i32, %c0_i32_0 : i32, i32
  }
  func.func @transform_2(%arg0: i32) -> (i32, i32) {
    %c0_i32 = arith.constant 0 : i32
    %c0_i32_0 = arith.constant 0 : i32
    %c0_i32_1 = arith.constant 0 : i32
    return %c0_i32, %c0_i32_0 : i32, i32
  }
  func.func @transform_3(%arg0: i32) -> (i32, i32) {
    %c0_i32 = arith.constant 0 : i32
    %c0_i32_0 = arith.constant 0 : i32
    %c0_i32_1 = arith.constant 0 : i32
    return %c0_i32, %c0_i32_0 : i32, i32
  }
  func.func @transform_4(%arg0: i32) -> (i32, i32) {
    %c0_i32 = arith.constant 0 : i32
    %c0_i32_0 = arith.constant 0 : i32
    %c0_i32_1 = arith.constant 0 : i32
    return %c0_i32, %c0_i32_0 : i32, i32
  }
  func.func @transform_5(%arg0: i32) -> (i32, i32) {
    %c0_i32 = arith.constant 0 : i32
    %c0_i32_0 = arith.constant 0 : i32
    %c0_i32_1 = arith.constant 0 : i32
    return %c0_i32, %c0_i32_0 : i32, i32
  }
  func.func @transform_6(%arg0: i32) -> (i32, i32) {
    %c0_i32 = arith.constant 0 : i32
    %c0_i32_0 = arith.constant 0 : i32
    %c0_i32_1 = arith.constant 0 : i32
    return %c0_i32, %c0_i32_0 : i32, i32
  }
  func.func @transform_7(%arg0: i32) -> (i32, i32) {
    %c0_i32 = arith.constant 0 : i32
    %c0_i32_0 = arith.constant 0 : i32
    %c0_i32_1 = arith.constant 0 : i32
    return %c0_i32, %c0_i32_0 : i32, i32
  }
  func.func @transform_8(%arg0: i32) -> (i32, i32) {
    %c0_i32 = arith.constant 0 : i32
    %c0_i32_0 = arith.constant 0 : i32
    %c0_i32_1 = arith.constant 0 : i32
    return %c0_i32, %c0_i32_0 : i32, i32
  }
  func.func @transform_9(%arg0: i32) -> (i32, i32) {
    %c0_i32 = arith.constant 0 : i32
    %c0_i32_0 = arith.constant 0 : i32
    %c0_i32_1 = arith.constant 0 : i32
    return %c0_i32, %c0_i32_0 : i32, i32
  }
  func.func @transform_10(%arg0: i32) -> (i32, i32) {
    %c0_i32 = arith.constant 0 : i32
    %c0_i32_0 = arith.constant 0 : i32
    %c0_i32_1 = arith.constant 0 : i32
    return %c0_i32, %c0_i32_0 : i32, i32
  }
  func.func @transform_11(%arg0: i32) -> (i32, i32) {
    %c0_i32 = arith.constant 0 : i32
    %c0_i32_0 = arith.constant 0 : i32
    %c0_i32_1 = arith.constant 0 : i32
    return %c0_i32, %c0_i32_0 : i32, i32
  }
  func.func @transform_12(%arg0: i32) -> (i32, i32) {
    %c0_i32 = arith.constant 0 : i32
    %c0_i32_0 = arith.constant 0 : i32
    return %c0_i32, %arg0 : i32, i32
  }
}

</mosaic_0001>

<llo_original>
// kernel: squeeze.2
$region0: #{squeeze.2}
  %s0 = inlined_call_operand.vmem [shape: f32[512], index: 0, kind: input, shape index: {}]
  %s1 = inlined_call_operand.hbm [shape: f32[2,1,16,16], index: 1, kind: output, shape index: {}]
  $region1: #{squeeze.2} parent=0
    #allocation0 [shape = 'u8[16384]{0}', space=vmem, size = 0x4000, scoped, tag = 'operand span for operand 1']
    #allocation1 [shape = 's32[1]{0}', space=sflag, size = 0x4, scoped, tag = 'scoped memory for squeeze.2']
    #allocation2 [shape = 'u8[4096]{0}', space=vmem, size = 0x1000, scoped, tag = 'scoped mem for input reshape']
    %2 = vsyncpa [#allocation1], 0
    %s4 = sshll.u32 1, 4
    %s5 = ssub.s32 %s4, 1
    %v6 = vld [vmem:[%s0] sm:%s5]
    %7 = vst [vmem:[#allocation2] sm:%s5] %v6
    %v8 = vld [vmem:[#allocation2] sm:$0xf]
    %vm9 = vcmask 130048
    %10 = vst.msk [vmem:[#allocation0] ss:$8 sm:$0xf] %vm9, %v8
    %v11 = vld [vmem:[#allocation2] sm:$0xf]
    %12 = vrot.lane.b32.xlu0 %v11, 112
    %v13 = vpop.permute.xlu0 %12
    %vm14 = vcmask 130048
    %s15 = scalar_lea.vmem [#allocation0], 1
    %16 = vst.msk [vmem:[%s15] ss:$8 sm:$0xf] %vm14, %v13
    %v17 = vld [vmem:[#allocation2] sm:$0xf]
    %18 = vrot.lane.b32.xlu0 %v17, 96
    %v19 = vpop.permute.xlu0 %18
    %vm20 = vcmask 130048
    %s21 = scalar_lea.vmem [#allocation0], 2
    %22 = vst.msk [vmem:[%s21] ss:$8 sm:$0xf] %vm20, %v19
    %v23 = vld [vmem:[#allocation2] sm:$0xf]
    %24 = vrot.lane.b32.xlu0 %v23, 80
    %v25 = vpop.permute.xlu0 %24
    %vm26 = vcmask 130048
    %s27 = scalar_lea.vmem [#allocation0], 3
    %28 = vst.msk [vmem:[%s27] ss:$8 sm:$0xf] %vm26, %v25
    %v29 = vld [vmem:[#allocation2] sm:$0xf]
    %30 = vrot.lane.b32.xlu0 %v29, 64
    %v31 = vpop.permute.xlu0 %30
    %vm32 = vcmask 130048
    %s33 = scalar_lea.vmem [#allocation0], 4
    %34 = vst.msk [vmem:[%s33] ss:$8 sm:$0xf] %vm32, %v31
    %v35 = vld [vmem:[#allocation2] sm:$0xf]
    %36 = vrot.lane.b32.xlu0 %v35, 48
    %v37 = vpop.permute.xlu0 %36
    %vm38 = vcmask 130048
    %s39 = scalar_lea.vmem [#allocation0], 5
    %40 = vst.msk [vmem:[%s39] ss:$8 sm:$0xf] %vm38, %v37
    %v41 = vld [vmem:[#allocation2] sm:$0xf]
    %42 = vrot.lane.b32.xlu0 %v41, 32
    %v43 = vpop.permute.xlu0 %42
    %vm44 = vcmask 130048
    %s45 = scalar_lea.vmem [#allocation0], 6
    %46 = vst.msk [vmem:[%s45] ss:$8 sm:$0xf] %vm44, %v43
    %v47 = vld [vmem:[#allocation2] sm:$0xf]
    %48 = vrot.lane.b32.xlu0 %v47, 16
    %v49 = vpop.permute.xlu0 %48
    %vm50 = vcmask 130048
    %s51 = scalar_lea.vmem [#allocation0], 7
    %52 = vst.msk [vmem:[%s51] ss:$8 sm:$0xf] %vm50, %v49
    %s54 = ssub.s32 512, 512
    %55 = vsyncadd [#allocation1], %s54
    %s57 = sshll.u32 [#allocation0], 4
    %s58 = int_to_ptr.vmem [resolvable:$true] %s57
    %60 = dma.vmem_to_hbm [thread:$0]  %s58, 512, %s1, [#allocation1]
    %61 = dma.done [#allocation1], 512
    %62 = vsyncpa [#allocation1], 1

// kernel: conv_autoencoder_forward.1
$region0: #{conv_autoencoder_forward.1}
  #allocation0 [shape = 'u32[]', space=smem, size = 0x4, offset = 0x4, fixed_abs, tag = 'smem constant byte address 0x4 - core index']
  #allocation1 [shape = 'u32[144,128]{1,0:T(1,128)}', space=vmem, size = 0x12000, scoped, tag = 'internal scratch']
  %s0 = inlined_call_operand.vmem [shape: f32[8,512], index: 0, kind: input, shape index: {}]
  %s1 = inlined_call_operand.vmem [shape: f32[8,72], index: 1, kind: input, shape index: {}]
  %s2 = inlined_call_operand.vmem [shape: f32[8,1], index: 2, kind: input, shape index: {}]
  %s3 = inlined_call_operand.vmem [shape: f32[8,72], index: 3, kind: input, shape index: {}]
  %s4 = inlined_call_operand.vmem [shape: f32[8,1], index: 4, kind: input, shape index: {}]
  %s5 = inlined_call_operand.vmem [shape: f32[8,72], index: 5, kind: input, shape index: {}]
  %s6 = inlined_call_operand.vmem [shape: f32[8,1], index: 6, kind: input, shape index: {}]
  %s7 = inlined_call_operand.vmem [shape: f32[8,72], index: 7, kind: input, shape index: {}]
  %s8 = inlined_call_operand.vmem [shape: f32[8,1], index: 8, kind: input, shape index: {}]
  %s9 = inlined_call_operand.vmem [shape: f32[9,256], index: 9, kind: input, shape index: {}]
  %s10 = inlined_call_operand.vmem [shape: f32[9,256], index: 10, kind: input, shape index: {}]
  %s11 = inlined_call_operand.vmem [shape: f32[4,256], index: 11, kind: input, shape index: {}]
  %s12 = inlined_call_operand.vmem [shape: f32[2,512], index: 12, kind: output, shape index: {}]
  %s13 = sld [smem:[#allocation0]]
  $region81: #{conv_autoencoder_forward.1} parent=0
    _
  %s15 = ssub.s32 1, %s13
  %s16 = scalar_select 0, %s15, %s13
  loop: start=0, step=1, limit=4
  $region2: #{conv_autoencoder_forward.1} parent=0 // loop_pre_header
    _
  $region3: #{conv_autoencoder_forward.1} parent=0 // loop_header
    %s18 = sphi 0, %s22
    %p19 = scmp.ge.s32.totalorder %s18, 4
    %s28 = sphi 0, %s30
    %s31 = sphi 0, %s28
    %s32 = sphi 0, %s31
    %s48 = sphi 0, %s32
    %s52 = sphi 0, %s52
    %s54 = sphi 0, %s52
    %s55 = sphi 0, %s54
    %s69 = sphi 0, %s55
    %s73 = sphi 0, %s73
    %s75 = sphi 0, %s73
    %s76 = sphi 0, %s75
    %s90 = sphi 0, %s76
    %s94 = sphi 0, %s94
    %s96 = sphi 0, %s94
    %s97 = sphi 0, %s96
    %s111 = sphi 0, %s97
    %s115 = sphi 0, %s115
    %s117 = sphi 0, %s115
    %s118 = sphi 0, %s117
    %s132 = sphi 0, %s118
    %s136 = sphi 0, %s136
    %s138 = sphi 0, %s136
    %s139 = sphi 0, %s138
    %s153 = sphi 0, %s139
    %s157 = sphi 0, %s157
    %s159 = sphi 0, %s157
    %s160 = sphi 0, %s159
    %s174 = sphi 0, %s160
    %s178 = sphi 0, %s178
    %s180 = sphi 0, %s178
    %s181 = sphi 0, %s180
    %s195 = sphi 0, %s181
    %s199 = sphi 0, %s199
    %s201 = sphi 0, %s199
    %s202 = sphi 0, %s201
    %s216 = sphi 0, %s202
    %s220 = sphi 0, %s220
    %s222 = sphi 0, %s220
    %s223 = sphi 0, %s222
    %s237 = sphi 0, %s223
    %s241 = sphi 0, %s241
    %s243 = sphi 0, %s241
    %s244 = sphi 0, %s243
    %s258 = sphi 0, %s244
    %s262 = sphi 0, %s262
    %s264 = sphi 0, %s262
    %s265 = sphi 0, %s264
    %s279 = sphi 0, %s265
    %s285 = sphi 0, %s287
    %s288 = sphi 0, %s285
    %s289 = sphi 0, %s288
    %s305 = sphi 0, %s289
  $region4: #{conv_autoencoder_forward.1} parent=0 // loop_header_branch
    %21 = sbr.rel (%p19) target = $region8
  $region5: #{conv_autoencoder_forward.1} parent=0 // loop_body
    %s23 = ssub.s32 %s18, 1
    %s24 = ssub.s32 %s18, 2
    %s25 = sadd.s32 %s18, 1
    %s26 = ssub.s32 %s18, %s25
    %p27 = scmp.eq.s32.totalorder %s26, 0
    %s29 = sadd.s32 %s28, 1
    %s30 = scalar_select %p27, %s28, %s29
    %p33 = pneg %p27
    %p34 = scmp.eq.s32.totalorder %s18, 1
    %p35 = por %p33, %p34
    %p36 = scmp.ne.s32.totalorder %s28, %s31
    %p37 = scmp.eq.s32.totalorder %s18, 0
    %p38 = por %p36, %p37
    %p39 = scmp.ne.s32.totalorder %s28, %s31
    %p40 = scmp.eq.s32.totalorder %s23, 1
    %p41 = por %p39, %p40
    %p42 = scmp.ne.s32.totalorder %s31, %s32
    %p43 = scmp.eq.s32.totalorder %s23, 0
    %p44 = por %p42, %p43
    %p45 = scmp.ne.s32.totalorder %s31, %s32
    %p46 = scmp.eq.s32.totalorder %s24, 1
    %p47 = por %p45, %p46
    %p49 = scmp.ne.s32.totalorder %s32, %s48
    %p50 = scmp.eq.s32.totalorder %s24, 0
    %p51 = por %p49, %p50
    %s53 = sadd.s32 %s52, 1
    %p56 = scmp.eq.s32.totalorder %s18, 1
    %p57 = scmp.ne.s32.totalorder %s52, %s54
    %p58 = scmp.eq.s32.totalorder %s18, 0
    %p59 = por %p57, %p58
    %p60 = scmp.ne.s32.totalorder %s52, %s54
    %p61 = scmp.eq.s32.totalorder %s23, 1
    %p62 = por %p60, %p61
    %p63 = scmp.ne.s32.totalorder %s54, %s55
    %p64 = scmp.eq.s32.totalorder %s23, 0
    %p65 = por %p63, %p64
    %p66 = scmp.ne.s32.totalorder %s54, %s55
    %p67 = scmp.eq.s32.totalorder %s24, 1
    %p68 = por %p66, %p67
    %p70 = scmp.ne.s32.totalorder %s55, %s69
    %p71 = scmp.eq.s32.totalorder %s24, 0
    %p72 = por %p70, %p71
    %s74 = sadd.s32 %s73, 1
    %p77 = scmp.eq.s32.totalorder %s18, 1
    %p78 = scmp.ne.s32.totalorder %s73, %s75
    %p79 = scmp.eq.s32.totalorder %s18, 0
    %p80 = por %p78, %p79
    %p81 = scmp.ne.s32.totalorder %s73, %s75
    %p82 = scmp.eq.s32.totalorder %s23, 1
    %p83 = por %p81, %p82
    %p84 = scmp.ne.s32.totalorder %s75, %s76
    %p85 = scmp.eq.s32.totalorder %s23, 0
    %p86 = por %p84, %p85
    %p87 = scmp.ne.s32.totalorder %s75, %s76
    %p88 = scmp.eq.s32.totalorder %s24, 1
    %p89 = por %p87, %p88
    %p91 = scmp.ne.s32.totalorder %s76, %s90
    %p92 = scmp.eq.s32.totalorder %s24, 0
    %p93 = por %p91, %p92
    %s95 = sadd.s32 %s94, 1
    %p98 = scmp.eq.s32.totalorder %s18, 1
    %p99 = scmp.ne.s32.totalorder %s94, %s96
    %p100 = scmp.eq.s32.totalorder %s18, 0
    %p101 = por %p99, %p100
    %p102 = scmp.ne.s32.totalorder %s94, %s96
    %p103 = scmp.eq.s32.totalorder %s23, 1
    %p104 = por %p102, %p103
    %p105 = scmp.ne.s32.totalorder %s96, %s97
    %p106 = scmp.eq.s32.totalorder %s23, 0
    %p107 = por %p105, %p106
    %p108 = scmp.ne.s32.totalorder %s96, %s97
    %p109 = scmp.eq.s32.totalorder %s24, 1
    %p110 = por %p108, %p109
    %p112 = scmp.ne.s32.totalorder %s97, %s111
    %p113 = scmp.eq.s32.totalorder %s24, 0
    %p114 = por %p112, %p113
    %s116 = sadd.s32 %s115, 1
    %p119 = scmp.eq.s32.totalorder %s18, 1
    %p120 = scmp.ne.s32.totalorder %s115, %s117
    %p121 = scmp.eq.s32.totalorder %s18, 0
    %p122 = por %p120, %p121
    %p123 = scmp.ne.s32.totalorder %s115, %s117
    %p124 = scmp.eq.s32.totalorder %s23, 1
    %p125 = por %p123, %p124
    %p126 = scmp.ne.s32.totalorder %s117, %s118
    %p127 = scmp.eq.s32.totalorder %s23, 0
    %p128 = por %p126, %p127
    %p129 = scmp.ne.s32.totalorder %s117, %s118
    %p130 = scmp.eq.s32.totalorder %s24, 1
    %p131 = por %p129, %p130
    %p133 = scmp.ne.s32.totalorder %s118, %s132
    %p134 = scmp.eq.s32.totalorder %s24, 0
    %p135 = por %p133, %p134
    %s137 = sadd.s32 %s136, 1
    %p140 = scmp.eq.s32.totalorder %s18, 1
    %p141 = scmp.ne.s32.totalorder %s136, %s138
    %p142 = scmp.eq.s32.totalorder %s18, 0
    %p143 = por %p141, %p142
    %p144 = scmp.ne.s32.totalorder %s136, %s138
    %p145 = scmp.eq.s32.totalorder %s23, 1
    %p146 = por %p144, %p145
    %p147 = scmp.ne.s32.totalorder %s138, %s139
    %p148 = scmp.eq.s32.totalorder %s23, 0
    %p149 = por %p147, %p148
    %p150 = scmp.ne.s32.totalorder %s138, %s139
    %p151 = scmp.eq.s32.totalorder %s24, 1
    %p152 = por %p150, %p151
    %p154 = scmp.ne.s32.totalorder %s139, %s153
    %p155 = scmp.eq.s32.totalorder %s24, 0
    %p156 = por %p154, %p155
    %s158 = sadd.s32 %s157, 1
    %p161 = scmp.eq.s32.totalorder %s18, 1
    %p162 = scmp.ne.s32.totalorder %s157, %s159
    %p163 = scmp.eq.s32.totalorder %s18, 0
    %p164 = por %p162, %p163
    %p165 = scmp.ne.s32.totalorder %s157, %s159
    %p166 = scmp.eq.s32.totalorder %s23, 1
    %p167 = por %p165, %p166
    %p168 = scmp.ne.s32.totalorder %s159, %s160
    %p169 = scmp.eq.s32.totalorder %s23, 0
    %p170 = por %p168, %p169
    %p171 = scmp.ne.s32.totalorder %s159, %s160
    %p172 = scmp.eq.s32.totalorder %s24, 1
    %p173 = por %p171, %p172
    %p175 = scmp.ne.s32.totalorder %s160, %s174
    %p176 = scmp.eq.s32.totalorder %s24, 0
    %p177 = por %p175, %p176
    %s179 = sadd.s32 %s178, 1
    %p182 = scmp.eq.s32.totalorder %s18, 1
    %p183 = scmp.ne.s32.totalorder %s178, %s180
    %p184 = scmp.eq.s32.totalorder %s18, 0
    %p185 = por %p183, %p184
    %p186 = scmp.ne.s32.totalorder %s178, %s180
    %p187 = scmp.eq.s32.totalorder %s23, 1
    %p188 = por %p186, %p187
    %p189 = scmp.ne.s32.totalorder %s180, %s181
    %p190 = scmp.eq.s32.totalorder %s23, 0
    %p191 = por %p189, %p190
    %p192 = scmp.ne.s32.totalorder %s180, %s181
    %p193 = scmp.eq.s32.totalorder %s24, 1
    %p194 = por %p192, %p193
    %p196 = scmp.ne.s32.totalorder %s181, %s195
    %p197 = scmp.eq.s32.totalorder %s24, 0
    %p198 = por %p196, %p197
    %s200 = sadd.s32 %s199, 1
    %p203 = scmp.eq.s32.totalorder %s18, 1
    %p204 = scmp.ne.s32.totalorder %s199, %s201
    %p205 = scmp.eq.s32.totalorder %s18, 0
    %p206 = por %p204, %p205
    %p207 = scmp.ne.s32.totalorder %s199, %s201
    %p208 = scmp.eq.s32.totalorder %s23, 1
    %p209 = por %p207, %p208
    %p210 = scmp.ne.s32.totalorder %s201, %s202
    %p211 = scmp.eq.s32.totalorder %s23, 0
    %p212 = por %p210, %p211
    %p213 = scmp.ne.s32.totalorder %s201, %s202
    %p214 = scmp.eq.s32.totalorder %s24, 1
    %p215 = por %p213, %p214
    %p217 = scmp.ne.s32.totalorder %s202, %s216
    %p218 = scmp.eq.s32.totalorder %s24, 0
    %p219 = por %p217, %p218
    %s221 = sadd.s32 %s220, 1
    %p224 = scmp.eq.s32.totalorder %s18, 1
    %p225 = scmp.ne.s32.totalorder %s220, %s222
    %p226 = scmp.eq.s32.totalorder %s18, 0
    %p227 = por %p225, %p226
    %p228 = scmp.ne.s32.totalorder %s220, %s222
    %p229 = scmp.eq.s32.totalorder %s23, 1
    %p230 = por %p228, %p229
    %p231 = scmp.ne.s32.totalorder %s222, %s223
    %p232 = scmp.eq.s32.totalorder %s23, 0
    %p233 = por %p231, %p232
    %p234 = scmp.ne.s32.totalorder %s222, %s223
    %p235 = scmp.eq.s32.totalorder %s24, 1
    %p236 = por %p234, %p235
    %p238 = scmp.ne.s32.totalorder %s223, %s237
    %p239 = scmp.eq.s32.totalorder %s24, 0
    %p240 = por %p238, %p239
    %s242 = sadd.s32 %s241, 1
    %p245 = scmp.eq.s32.totalorder %s18, 1
    %p246 = scmp.ne.s32.totalorder %s241, %s243
    %p247 = scmp.eq.s32.totalorder %s18, 0
    %p248 = por %p246, %p247
    %p249 = scmp.ne.s32.totalorder %s241, %s243
    %p250 = scmp.eq.s32.totalorder %s23, 1
    %p251 = por %p249, %p250
    %p252 = scmp.ne.s32.totalorder %s243, %s244
    %p253 = scmp.eq.s32.totalorder %s23, 0
    %p254 = por %p252, %p253
    %p255 = scmp.ne.s32.totalorder %s243, %s244
    %p256 = scmp.eq.s32.totalorder %s24, 1
    %p257 = por %p255, %p256
    %p259 = scmp.ne.s32.totalorder %s244, %s258
    %p260 = scmp.eq.s32.totalorder %s24, 0
    %p261 = por %p259, %p260
    %s263 = sadd.s32 %s262, 1
    %p266 = scmp.eq.s32.totalorder %s18, 1
    %p267 = scmp.ne.s32.totalorder %s262, %s264
    %p268 = scmp.eq.s32.totalorder %s18, 0
    %p269 = por %p267, %p268
    %p270 = scmp.ne.s32.totalorder %s262, %s264
    %p271 = scmp.eq.s32.totalorder %s23, 1
    %p272 = por %p270, %p271
    %p273 = scmp.ne.s32.totalorder %s264, %s265
    %p274 = scmp.eq.s32.totalorder %s23, 0
    %p275 = por %p273, %p274
    %p276 = scmp.ne.s32.totalorder %s264, %s265
    %p277 = scmp.eq.s32.totalorder %s24, 1
    %p278 = por %p276, %p277
    %p280 = scmp.ne.s32.totalorder %s265, %s279
    %p281 = scmp.eq.s32.totalorder %s24, 0
    %p282 = por %p280, %p281
    %s283 = ssub.s32 %s18, %s25
    %p284 = scmp.eq.s32.totalorder %s283, 0
    %s286 = sadd.s32 %s285, 1
    %s287 = scalar_select %p284, %s285, %s286
    %p290 = pneg %p284
    %p291 = scmp.eq.s32.totalorder %s18, 1
    %p292 = por %p290, %p291
    %p293 = scmp.ne.s32.totalorder %s285, %s288
    %p294 = scmp.eq.s32.totalorder %s18, 0
    %p295 = por %p293, %p294
    %p296 = scmp.ne.s32.totalorder %s285, %s288
    %p297 = scmp.eq.s32.totalorder %s23, 1
    %p298 = por %p296, %p297
    %p299 = scmp.ne.s32.totalorder %s288, %s289
    %p300 = scmp.eq.s32.totalorder %s23, 0
    %p301 = por %p299, %p300
    %p302 = scmp.ne.s32.totalorder %s288, %s289
    %p303 = scmp.eq.s32.totalorder %s24, 1
    %p304 = por %p302, %p303
    %p306 = scmp.ne.s32.totalorder %s289, %s305
    %p307 = scmp.eq.s32.totalorder %s24, 0
    %p308 = por %p306, %p307
    %p309 = scmp.le.s32.totalorder 1, %s18
    %p310 = scmp.lt.s32.totalorder %s18, 3
    %p311 = pnand %p309, %p310
    %p312 = pneg %p311
    // Predicated region
    $region9: #{conv_autoencoder_forward.1} parent=5 // pred_check
      _
    $region10: #{conv_autoencoder_forward.1} parent=5 // pred_check_branch
      %314 = sbr.rel (%p311) target = $region12
    $region11: #{conv_autoencoder_forward.1} parent=5 // pred_region
      %s315 = ssub.s32 %s18, 1
      // Predicated region
      $region13: #{conv_autoencoder_forward.1} parent=11 // pred_check
        %p316 = pneg %p65
      $region14: #{conv_autoencoder_forward.1} parent=11 // pred_check_branch
        %318 = sbr.rel (%p316) target = $region16
      $region15: #{conv_autoencoder_forward.1} parent=11 // pred_region
        _
      $region16: #{conv_autoencoder_forward.1} parent=11 // pred_fallthru
        _
      // Predicated region
      $region17: #{conv_autoencoder_forward.1} parent=11 // pred_check
        %p319 = pneg %p86
      $region18: #{conv_autoencoder_forward.1} parent=11 // pred_check_branch
        %321 = sbr.rel (%p319) target = $region20
      $region19: #{conv_autoencoder_forward.1} parent=11 // pred_region
        _
      $region20: #{conv_autoencoder_forward.1} parent=11 // pred_fallthru
        _
      // Predicated region
      $region21: #{conv_autoencoder_forward.1} parent=11 // pred_check
        %p322 = pneg %p107
      $region22: #{conv_autoencoder_forward.1} parent=11 // pred_check_branch
        %324 = sbr.rel (%p322) target = $region24
      $region23: #{conv_autoencoder_forward.1} parent=11 // pred_region
        _
      $region24: #{conv_autoencoder_forward.1} parent=11 // pred_fallthru
        _
      // Predicated region
      $region25: #{conv_autoencoder_forward.1} parent=11 // pred_check
        %p325 = pneg %p128
      $region26: #{conv_autoencoder_forward.1} parent=11 // pred_check_branch
        %327 = sbr.rel (%p325) target = $region28
      $region27: #{conv_autoencoder_forward.1} parent=11 // pred_region
        _
      $region28: #{conv_autoencoder_forward.1} parent=11 // pred_fallthru
        _
      // Predicated region
      $region29: #{conv_autoencoder_forward.1} parent=11 // pred_check
        %p328 = pneg %p149
      $region30: #{conv_autoencoder_forward.1} parent=11 // pred_check_branch
        %330 = sbr.rel (%p328) target = $region32
      $region31: #{conv_autoencoder_forward.1} parent=11 // pred_region
        _
      $region32: #{conv_autoencoder_forward.1} parent=11 // pred_fallthru
        _
      // Predicated region
      $region33: #{conv_autoencoder_forward.1} parent=11 // pred_check
        %p331 = pneg %p170
      $region34: #{conv_autoencoder_forward.1} parent=11 // pred_check_branch
        %333 = sbr.rel (%p331) target = $region36
      $region35: #{conv_autoencoder_forward.1} parent=11 // pred_region
        _
      $region36: #{conv_autoencoder_forward.1} parent=11 // pred_fallthru
        _
      // Predicated region
      $region37: #{conv_autoencoder_forward.1} parent=11 // pred_check
        %p334 = pneg %p191
      $region38: #{conv_autoencoder_forward.1} parent=11 // pred_check_branch
        %336 = sbr.rel (%p334) target = $region40
      $region39: #{conv_autoencoder_forward.1} parent=11 // pred_region
        _
      $region40: #{conv_autoencoder_forward.1} parent=11 // pred_fallthru
        _
      // Predicated region
      $region41: #{conv_autoencoder_forward.1} parent=11 // pred_check
        %p337 = pneg %p212
      $region42: #{conv_autoencoder_forward.1} parent=11 // pred_check_branch
        %339 = sbr.rel (%p337) target = $region44
      $region43: #{conv_autoencoder_forward.1} parent=11 // pred_region
        _
      $region44: #{conv_autoencoder_forward.1} parent=11 // pred_fallthru
        _
      // Predicated region
      $region45: #{conv_autoencoder_forward.1} parent=11 // pred_check
        %p340 = pneg %p233
      $region46: #{conv_autoencoder_forward.1} parent=11 // pred_check_branch
        %342 = sbr.rel (%p340) target = $region48
      $region47: #{conv_autoencoder_forward.1} parent=11 // pred_region
        _
      $region48: #{conv_autoencoder_forward.1} parent=11 // pred_fallthru
        _
      // Predicated region
      $region49: #{conv_autoencoder_forward.1} parent=11 // pred_check
        %p343 = pneg %p254
      $region50: #{conv_autoencoder_forward.1} parent=11 // pred_check_branch
        %345 = sbr.rel (%p343) target = $region52
      $region51: #{conv_autoencoder_forward.1} parent=11 // pred_region
        _
      $region52: #{conv_autoencoder_forward.1} parent=11 // pred_fallthru
        _
      // Predicated region
      $region53: #{conv_autoencoder_forward.1} parent=11 // pred_check
        %p346 = pneg %p275
      $region54: #{conv_autoencoder_forward.1} parent=11 // pred_check_branch
        %348 = sbr.rel (%p346) target = $region56
      $region55: #{conv_autoencoder_forward.1} parent=11 // pred_region
        _
      $region56: #{conv_autoencoder_forward.1} parent=11 // pred_fallthru
        _
    $region12: #{conv_autoencoder_forward.1} parent=5 // pred_fallthru
      _
    %p349 = scmp.lt.s32.totalorder %s18, 2
    // Predicated region
    $region57: #{conv_autoencoder_forward.1} parent=5 // pred_check
      %p350 = pneg %p349
    $region58: #{conv_autoencoder_forward.1} parent=5 // pred_check_branch
      %352 = sbr.rel (%p350) target = $region60
    $region59: #{conv_autoencoder_forward.1} parent=5 // pred_region
      // Predicated region
      $region61: #{conv_autoencoder_forward.1} parent=59 // pred_check
        %p353 = pneg %p38
      $region62: #{conv_autoencoder_forward.1} parent=59 // pred_check_branch
        %355 = sbr.rel (%p353) target = $region64
      $region63: #{conv_autoencoder_forward.1} parent=59 // pred_region
        %s356 = smul.u32 2, %s18
        %p357 = scmp.lt.s32.totalorder %s356, 3
        %s358 = scalar_select %p357, %s356, 3
        %s359 = smul.addr %s358, 8
        %s360 = scalar_lea.vmem %s0, %s359
        %s361 = smul.u32 2, %s18
      $region64: #{conv_autoencoder_forward.1} parent=59 // pred_fallthru
        _
    $region60: #{conv_autoencoder_forward.1} parent=5 // pred_fallthru
      _
    %p362 = scmp.le.s32.totalorder 1, %s18
    %p363 = scmp.lt.s32.totalorder %s18, 3
    %p364 = pnand %p362, %p363
    %p365 = pneg %p364
    // Predicated region
    $region65: #{conv_autoencoder_forward.1} parent=5 // pred_check
      _
    $region66: #{conv_autoencoder_forward.1} parent=5 // pred_check_branch
      %367 = sbr.rel (%p364) target = $region68
    $region67: #{conv_autoencoder_forward.1} parent=5 // pred_region
      %s368 = ssub.s32 %s18, 1
      %s369 = smul.u32 2, %s23
      %p370 = scmp.lt.s32.totalorder %s369, 3
      %s371 = scalar_select %p370, %s369, 3
      %s372 = smul.addr %s371, 8
      %s373 = scalar_lea.vmem %s0, %s372
      %p374 = pneg %p44
      %p375 = pneg %p41
      %p376 = pneg %p65
      %p377 = pneg %p62
      %p378 = pneg %p86
      %p379 = pneg %p83
      %p380 = pneg %p107
      %p381 = pneg %p104
      %p382 = pneg %p128
      %p383 = pneg %p125
      %p384 = pneg %p149
      %p385 = pneg %p146
      %p386 = pneg %p170
      %p387 = pneg %p167
      %p388 = pneg %p191
      %p389 = pneg %p188
      %p390 = pneg %p212
      %p391 = pneg %p209
      %p392 = pneg %p233
      %p393 = pneg %p230
      %p394 = pneg %p254
      %p395 = pneg %p251
      %p396 = pneg %p275
      %p397 = pneg %p272
      %p398 = pneg %p301
      %p399 = pneg %p298
      %s400 = smul.u32 2, %s23
      %p401 = scmp.lt.s32.totalorder %s400, 3
      %s402 = scalar_select %p401, %s400, 3
      %s403 = smul.addr %s402, 2
      %s404 = scalar_lea.vmem %s12, %s403
      %s405 = smul.u32 2, %s23
      %p406 = scmp.lt.s32.totalorder %s405, 3
      %s407 = scalar_select %p406, %s405, 3
      %s408 = smul.addr %s407, 8
      %s409 = scalar_lea.vmem %s0, %s408
      %s410 = smul.u32 2, %s23
      %s411 = smul.u32 2, %s23
      %p412 = scmp.lt.s32.totalorder %s411, 3
      %s413 = scalar_select %p412, %s411, 3
      %s414 = smul.addr %s413, 2
      %s415 = scalar_lea.vmem %s12, %s414
      %s416 = smul.u32 2, %s23
      %v417 = vld [vmem:[%s11] ss:$4 sm:$0x3]
      %vm418 = vcmp.ne.f32.partialorder %v417, 0.0
      %s419 = scalar_lea.vmem %s11, 1
      %v420 = vld [vmem:[%s419] ss:$4 sm:$0x3]
      %vm421 = vcmp.ne.f32.partialorder %v420, 0.0
      %s422 = scalar_lea.vmem %s11, 2
      %v423 = vld [vmem:[%s422] ss:$4 sm:$0x3]
      %vm424 = vcmp.ne.f32.partialorder %v423, 0.0
      %s425 = scalar_lea.vmem %s11, 3
      %v426 = vld [vmem:[%s425] ss:$4 sm:$0x3]
      %vm427 = vcmp.ne.f32.partialorder %v426, 0.0
      %v428 = vld [vmem:[%s409] sm:$0xff]
      %v429 = vld [vmem:[%s409 + $0x8] sm:$0xff]
      %430 = vrot.lane.b32.xlu0 %v428, 17
      %v431 = vpop.permute.xlu0 %430
      %432 = vrot.lane.b32.xlu0 %v429, 17
      %v433 = vpop.permute.xlu0 %432
      %v434 = vlaneseq
      %v435 = vand.u32 %v434, 127
      %vm436 = vcmp.lt.s32.totalorder %v435, 17
      %v437 = vsel %vm436, %v431, %v433
      %v438 = vsel %vm436, %v433, %v431
      %v439 = vld [vmem:[%s9] ss:$8 sm:$0x3]
      %v441 = vlaneseq
      %v442 = vshrl.u32 %v441, 7
      %v443 = vsub.s32 0, %v442
      %v444 = vrot.slane %v439, %v443
      %v445 = vlaneseq
      %v446 = vshrl.u32 %v445, 7
      %v447 = vsub.s32 1, %v446
      %v448 = vrot.slane %v439, %v447
      %v451 = vmul.f32 %v438, %v444
      %v452 = vmul.f32 %v437, %v448
      %453 = vrot.lane.b32.xlu0 %v428, 16
      %v454 = vpop.permute.xlu0 %453
      %455 = vrot.lane.b32.xlu0 %v429, 16
      %v456 = vpop.permute.xlu0 %455
      %vm457 = vcmp.lt.s32.totalorder %v435, 16
      %v458 = vsel %vm457, %v454, %v456
      %v459 = vsel %vm457, %v456, %v454
      %s460 = scalar_lea.vmem %s9, 1
      %v461 = vld [vmem:[%s460] ss:$8 sm:$0x3]
      %v463 = vlaneseq
      %v464 = vshrl.u32 %v463, 7
      %v465 = vsub.s32 0, %v464
      %v466 = vrot.slane %v461, %v465
      %v467 = vlaneseq
      %v468 = vshrl.u32 %v467, 7
      %v469 = vsub.s32 1, %v468
      %v470 = vrot.slane %v461, %v469
      %v473 = vmul.f32 %v459, %v466
      %v474 = vmul.f32 %v458, %v470
      %475 = vrot.lane.b32.xlu0 %v428, 15
      %v476 = vpop.permute.xlu0 %475
      %477 = vrot.lane.b32.xlu0 %v429, 15
      %v478 = vpop.permute.xlu0 %477
      %vm479 = vcmp.lt.s32.totalorder %v435, 15
      %v480 = vsel %vm479, %v476, %v478
      %v481 = vsel %vm479, %v478, %v476
      %s482 = scalar_lea.vmem %s9, 2
      %v483 = vld [vmem:[%s482] ss:$8 sm:$0x3]
      %v485 = vlaneseq
      %v486 = vshrl.u32 %v485, 7
      %v487 = vsub.s32 0, %v486
      %v488 = vrot.slane %v483, %v487
      %v489 = vlaneseq
      %v490 = vshrl.u32 %v489, 7
      %v491 = vsub.s32 1, %v490
      %v492 = vrot.slane %v483, %v491
      %v495 = vmul.f32 %v481, %v488
      %v496 = vmul.f32 %v480, %v492
      %497 = vrot.lane.b32.xlu0 %v428, 1
      %v498 = vpop.permute.xlu0 %497
      %499 = vrot.lane.b32.xlu0 %v429, 1
      %v500 = vpop.permute.xlu0 %499
      %vm501 = vcmp.lt.s32.totalorder %v435, 1
      %v502 = vsel %vm501, %v498, %v500
      %v503 = vsel %vm501, %v500, %v498
      %s504 = scalar_lea.vmem %s9, 3
      %v505 = vld [vmem:[%s504] ss:$8 sm:$0x3]
      %v507 = vlaneseq
      %v508 = vshrl.u32 %v507, 7
      %v509 = vsub.s32 0, %v508
      %v510 = vrot.slane %v505, %v509
      %v511 = vlaneseq
      %v512 = vshrl.u32 %v511, 7
      %v513 = vsub.s32 1, %v512
      %v514 = vrot.slane %v505, %v513
      %v517 = vmul.f32 %v503, %v510
      %v518 = vmul.f32 %v502, %v514
      %519 = vrot.lane.b32.xlu0 %v428, 127
      %v520 = vpop.permute.xlu0 %519
      %521 = vrot.lane.b32.xlu0 %v429, 127
      %v522 = vpop.permute.xlu0 %521
      %vm523 = vcmp.lt.s32.totalorder %v435, 127
      %v524 = vsel %vm523, %v520, %v522
      %v525 = vsel %vm523, %v522, %v520
      %s526 = scalar_lea.vmem %s9, 5
      %v527 = vld [vmem:[%s526] ss:$8 sm:$0x3]
      %v529 = vlaneseq
      %v530 = vshrl.u32 %v529, 7
      %v531 = vsub.s32 0, %v530
      %v532 = vrot.slane %v527, %v531
      %v533 = vlaneseq
      %v534 = vshrl.u32 %v533, 7
      %v535 = vsub.s32 1, %v534
      %v536 = vrot.slane %v527, %v535
      %v539 = vmul.f32 %v524, %v532
      %v540 = vmul.f32 %v525, %v536
      %541 = vrot.lane.b32.xlu0 %v428, 113
      %v542 = vpop.permute.xlu0 %541
      %543 = vrot.lane.b32.xlu0 %v429, 113
      %v544 = vpop.permute.xlu0 %543
      %vm545 = vcmp.lt.s32.totalorder %v435, 113
      %v546 = vsel %vm545, %v542, %v544
      %v547 = vsel %vm545, %v544, %v542
      %s548 = scalar_lea.vmem %s9, 6
      %v549 = vld [vmem:[%s548] ss:$8 sm:$0x3]
      %v551 = vlaneseq
      %v552 = vshrl.u32 %v551, 7
      %v553 = vsub.s32 0, %v552
      %v554 = vrot.slane %v549, %v553
      %v555 = vlaneseq
      %v556 = vshrl.u32 %v555, 7
      %v557 = vsub.s32 1, %v556
      %v558 = vrot.slane %v549, %v557
      %v561 = vmul.f32 %v546, %v554
      %v562 = vmul.f32 %v547, %v558
      %563 = vrot.lane.b32.xlu0 %v428, 112
      %v564 = vpop.permute.xlu0 %563
      %565 = vrot.lane.b32.xlu0 %v429, 112
      %v566 = vpop.permute.xlu0 %565
      %vm567 = vcmp.lt.s32.totalorder %v435, 112
      %v568 = vsel %vm567, %v564, %v566
      %v569 = vsel %vm567, %v566, %v564
      %s570 = scalar_lea.vmem %s9, 7
      %v571 = vld [vmem:[%s570] ss:$8 sm:$0x3]
      %v573 = vlaneseq
      %v574 = vshrl.u32 %v573, 7
      %v575 = vsub.s32 0, %v574
      %v576 = vrot.slane %v571, %v575
      %v577 = vlaneseq
      %v578 = vshrl.u32 %v577, 7
      %v579 = vsub.s32 1, %v578
      %v580 = vrot.slane %v571, %v579
      %v583 = vmul.f32 %v568, %v576
      %v584 = vmul.f32 %v569, %v580
      %585 = vrot.lane.b32.xlu0 %v428, 111
      %v586 = vpop.permute.xlu0 %585
      %587 = vrot.lane.b32.xlu0 %v429, 111
      %v588 = vpop.permute.xlu0 %587
      %vm589 = vcmp.lt.s32.totalorder %v435, 111
      %v590 = vsel %vm589, %v586, %v588
      %v591 = vsel %vm589, %v588, %v586
      %s592 = scalar_lea.vmem %s9, 16
      %v593 = vld [vmem:[%s592] ss:$8 sm:$0x3]
      %v595 = vlaneseq
      %v596 = vshrl.u32 %v595, 7
      %v597 = vsub.s32 0, %v596
      %v598 = vrot.slane %v593, %v597
      %v599 = vlaneseq
      %v600 = vshrl.u32 %v599, 7
      %v601 = vsub.s32 1, %v600
      %v602 = vrot.slane %v593, %v601
      %v605 = vmul.f32 %v590, %v598
      %v606 = vmul.f32 %v591, %v602
      %v607 = vld [vmem:[%s1] sm:$0xff]
      %v608 = vld [vmem:[%s2] sm:$0xff]
      %610 = vset.pattern.permute.xlu0 0
      %611 = vperm.xlu0 %610, %v608
      %v612 = vpop.permute.xlu0 %611
      %vm614 = vcmask 588800
      %v616 = vsel %vm614, %v607, 0
      %618 = vmatprep.subr.mxu0 0.0
      %619 = vmatpush1.msra.mxu0 0.0
      %620 = vmatprep.subr.mxu0 0.0
      %621 = vmatpush1.msra.mxu0 0.0
      %622 = vmatprep.subr.mxu0 0.0
      %623 = vmatpush1.msra.mxu0 0.0
      %624 = vmatprep.subr.mxu0 0.0
      %625 = vmatpush1.msra.mxu0 0.0
      %626 = vmatprep.subr.mxu0 0.0
      %627 = vmatpush1.msra.mxu0 0.0
      %628 = vmatprep.subr.mxu0 0.0
      %629 = vmatpush1.msra.mxu0 0.0
      %630 = vmatprep.subr.mxu0 0.0
      %631 = vmatpush1.msra.mxu0 0.0
      %632 = vmatprep.subr.mxu0 %v606
      %633 = vmatpush1.msra.mxu0 %v605
      %634 = vmatprep.subr.mxu0 %v584
      %635 = vmatpush1.msra.mxu0 %v583
      %636 = vmatprep.subr.mxu0 %v562
      %637 = vmatpush1.msra.mxu0 %v561
      %638 = vmatprep.subr.mxu0 %v540
      %639 = vmatpush1.msra.mxu0 %v539
      %640 = vmatprep.subr.mxu0 %v429
      %641 = vmatpush1.msra.mxu0 %v428
      %642 = vmatprep.subr.mxu0 %v518
      %643 = vmatpush1.msra.mxu0 %v517
      %644 = vmatprep.subr.mxu0 %v496
      %645 = vmatpush1.msra.mxu0 %v495
      %646 = vmatprep.subr.mxu0 %v474
      %647 = vmatpush1.msra.mxu0 %v473
      %648 = vmatprep.subr.mxu0 %v452
      %649 = vmatpush1.msra.mxu0 %v451
      %650 = vmatprep.subr.mxu0 0.0
      %651 = vmatpush2.msra.mxu0 0.0
      %652 = vmatprep.subr.mxu0 0.0
      %653 = vmatpush2.msra.mxu0 0.0
      %654 = vmatprep.subr.mxu0 0.0
      %655 = vmatpush2.msra.mxu0 0.0
      %656 = vmatprep.subr.mxu0 0.0
      %657 = vmatpush2.msra.mxu0 0.0
      %658 = vmatprep.subr.mxu0 0.0
      %659 = vmatpush2.msra.mxu0 0.0
      %660 = vmatprep.subr.mxu0 0.0
      %661 = vmatpush2.msra.mxu0 0.0
      %662 = vmatprep.subr.mxu0 0.0
      %663 = vmatpush2.msra.mxu0 0.0
      %664 = vmatprep.subr.mxu0 0.0
      %665 = vmatpush2.msra.mxu0 0.0
      %666 = vmatprep.subr.mxu0 0.0
      %667 = vmatpush2.msra.mxu0 0.0
      %668 = vmatprep.subr.mxu0 0.0
      %669 = vmatpush2.msra.mxu0 0.0
      %670 = vmatprep.subr.mxu0 0.0
      %671 = vmatpush2.msra.mxu0 0.0
      %672 = vmatprep.subr.mxu0 0.0
      %673 = vmatpush2.msra.mxu0 0.0
      %674 = vmatprep.subr.mxu0 0.0
      %675 = vmatpush2.msra.mxu0 0.0
      %676 = vmatprep.subr.mxu0 0.0
      %677 = vmatpush2.msra.mxu0 0.0
      %678 = vmatprep.subr.mxu0 0.0
      %679 = vmatpush2.msra.mxu0 0.0
      %680 = vmatprep.subr.mxu0 0.0
      %681 = vmatpush2.msra.mxu0 0.0
      %682 = vmatprep.mubr.f32.mxu0 0.0
      %683 = vmatmul.mubr.f32.gmra.mxu0 %v616
      %v684 = vpop.f32.mrf.mxu0
      %v685 = vadd.f32 %v612, %v684
      %v686 = vpop.f32.mrf.mxu0
      %v687 = vadd.f32 %v612, %v686
      %688 = vdwg.mxu0
      %v689 = vmul.f32 %v685, 0.01
      %v690 = vmul.f32 %v687, 0.01
      %v691 = vmax.f32 %v685, %v689
      %v692 = vmax.f32 %v687, %v690
      %693 = vrot.lane.b32.xlu0 %v691, 127
      %v694 = vpop.permute.xlu0 %693
      %695 = vrot.lane.b32.xlu0 %v692, 127
      %v696 = vpop.permute.xlu0 %695
      %v697 = vsel %vm523, %v694, %v696
      %v698 = vsel %vm523, %v696, %v694
      %699 = vrot.lane.b32.xlu0 %v691, 1
      %v700 = vpop.permute.xlu0 %699
      %701 = vrot.lane.b32.xlu0 %v692, 1
      %v702 = vpop.permute.xlu0 %701
      %v703 = vsel %vm501, %v700, %v702
      %v704 = vsel %vm501, %v702, %v700
      %v705 = vsel %vm418, 1, 0
      %v706 = vlaneseq
      %v707 = vshrl.u32 %v706, 7
      %v708 = vsub.s32 0, %v707
      %v709 = vrot.slane %v705, %v708
      %v710 = vlaneseq
      %v711 = vshrl.u32 %v710, 7
      %v712 = vsub.s32 1, %v711
      %v713 = vrot.slane %v705, %v712
      %vm714 = vcmp.eq.s32.totalorder %v709, 1
      %vm715 = vcmp.eq.s32.totalorder %v713, 1
      %v716 = vsel %vm714, %v697, %v704
      %v717 = vsel %vm715, %v698, %v703
      %v718 = vmax.f32 %v691, %v716
      %v719 = vmax.f32 %v692, %v717
      %720 = vrot.lane.b32.xlu0 %v718, 112
      %v721 = vpop.permute.xlu0 %720
      %722 = vrot.lane.b32.xlu0 %v719, 112
      %v723 = vpop.permute.xlu0 %722
      %v724 = vsel %vm567, %v721, %v723
      %v725 = vsel %vm567, %v723, %v721
      %726 = vrot.lane.b32.xlu0 %v718, 16
      %v727 = vpop.permute.xlu0 %726
      %728 = vrot.lane.b32.xlu0 %v719, 16
      %v729 = vpop.permute.xlu0 %728
      %v730 = vsel %vm457, %v727, %v729
      %v731 = vsel %vm457, %v729, %v727
      %v732 = vsel %vm421, 1, 0
      %v733 = vlaneseq
      %v734 = vshrl.u32 %v733, 7
      %v735 = vsub.s32 0, %v734
      %v736 = vrot.slane %v732, %v735
      %v737 = vlaneseq
      %v738 = vshrl.u32 %v737, 7
      %v739 = vsub.s32 1, %v738
      %v740 = vrot.slane %v732, %v739
      %vm741 = vcmp.eq.s32.totalorder %v736, 1
      %vm742 = vcmp.eq.s32.totalorder %v740, 1
      %v743 = vsel %vm741, %v724, %v731
      %v744 = vsel %vm742, %v725, %v730
      %v745 = vmax.f32 %v718, %v743
      %v746 = vmax.f32 %v719, %v744
      %747 = vrot.lane.b32.xlu0 %v745, 34
      %v748 = vpop.permute.xlu0 %747
      %749 = vrot.lane.b32.xlu0 %v746, 34
      %v750 = vpop.permute.xlu0 %749
      %vm751 = vcmp.lt.s32.totalorder %v435, 34
      %v752 = vsel %vm751, %v748, %v750
      %v753 = vsel %vm751, %v750, %v748
      %v754 = vld [vmem:[%s10] ss:$8 sm:$0x3]
      %v756 = vlaneseq
      %v757 = vshrl.u32 %v756, 7
      %v758 = vsub.s32 0, %v757
      %v759 = vrot.slane %v754, %v758
      %v760 = vlaneseq
      %v761 = vshrl.u32 %v760, 7
      %v762 = vsub.s32 1, %v761
      %v763 = vrot.slane %v754, %v762
      %v766 = vmul.f32 %v753, %v759
      %v767 = vmul.f32 %v752, %v763
      %768 = vrot.lane.b32.xlu0 %v745, 32
      %v769 = vpop.permute.xlu0 %768
      %770 = vrot.lane.b32.xlu0 %v746, 32
      %v771 = vpop.permute.xlu0 %770
      %vm772 = vcmp.lt.s32.totalorder %v435, 32
      %v773 = vsel %vm772, %v769, %v771
      %v774 = vsel %vm772, %v771, %v769
      %s775 = scalar_lea.vmem %s10, 1
      %v776 = vld [vmem:[%s775] ss:$8 sm:$0x3]
      %v778 = vlaneseq
      %v779 = vshrl.u32 %v778, 7
      %v780 = vsub.s32 0, %v779
      %v781 = vrot.slane %v776, %v780
      %v782 = vlaneseq
      %v783 = vshrl.u32 %v782, 7
      %v784 = vsub.s32 1, %v783
      %v785 = vrot.slane %v776, %v784
      %v788 = vmul.f32 %v774, %v781
      %v789 = vmul.f32 %v773, %v785
      %790 = vrot.lane.b32.xlu0 %v745, 30
      %v791 = vpop.permute.xlu0 %790
      %792 = vrot.lane.b32.xlu0 %v746, 30
      %v793 = vpop.permute.xlu0 %792
      %vm794 = vcmp.lt.s32.totalorder %v435, 30
      %v795 = vsel %vm794, %v791, %v793
      %v796 = vsel %vm794, %v793, %v791
      %s797 = scalar_lea.vmem %s10, 2
      %v798 = vld [vmem:[%s797] ss:$8 sm:$0x3]
      %v800 = vlaneseq
      %v801 = vshrl.u32 %v800, 7
      %v802 = vsub.s32 0, %v801
      %v803 = vrot.slane %v798, %v802
      %v804 = vlaneseq
      %v805 = vshrl.u32 %v804, 7
      %v806 = vsub.s32 1, %v805
      %v807 = vrot.slane %v798, %v806
      %v810 = vmul.f32 %v796, %v803
      %v811 = vmul.f32 %v795, %v807
      %812 = vrot.lane.b32.xlu0 %v745, 2
      %v813 = vpop.permute.xlu0 %812
      %814 = vrot.lane.b32.xlu0 %v746, 2
      %v815 = vpop.permute.xlu0 %814
      %vm816 = vcmp.lt.s32.totalorder %v435, 2
      %v817 = vsel %vm816, %v813, %v815
      %v818 = vsel %vm816, %v815, %v813
      %s819 = scalar_lea.vmem %s10, 3
      %v820 = vld [vmem:[%s819] ss:$8 sm:$0x3]
      %v822 = vlaneseq
      %v823 = vshrl.u32 %v822, 7
      %v824 = vsub.s32 0, %v823
      %v825 = vrot.slane %v820, %v824
      %v826 = vlaneseq
      %v827 = vshrl.u32 %v826, 7
      %v828 = vsub.s32 1, %v827
      %v829 = vrot.slane %v820, %v828
      %v832 = vmul.f32 %v818, %v825
      %v833 = vmul.f32 %v817, %v829
      %834 = vrot.lane.b32.xlu0 %v745, 126
      %v835 = vpop.permute.xlu0 %834
      %836 = vrot.lane.b32.xlu0 %v746, 126
      %v837 = vpop.permute.xlu0 %836
      %vm838 = vcmp.lt.s32.totalorder %v435, 126
      %v839 = vsel %vm838, %v835, %v837
      %v840 = vsel %vm838, %v837, %v835
      %s841 = scalar_lea.vmem %s10, 5
      %v842 = vld [vmem:[%s841] ss:$8 sm:$0x3]
      %v844 = vlaneseq
      %v845 = vshrl.u32 %v844, 7
      %v846 = vsub.s32 0, %v845
      %v847 = vrot.slane %v842, %v846
      %v848 = vlaneseq
      %v849 = vshrl.u32 %v848, 7
      %v850 = vsub.s32 1, %v849
      %v851 = vrot.slane %v842, %v850
      %v854 = vmul.f32 %v839, %v847
      %v855 = vmul.f32 %v840, %v851
      %856 = vrot.lane.b32.xlu0 %v745, 98
      %v857 = vpop.permute.xlu0 %856
      %858 = vrot.lane.b32.xlu0 %v746, 98
      %v859 = vpop.permute.xlu0 %858
      %vm860 = vcmp.lt.s32.totalorder %v435, 98
      %v861 = vsel %vm860, %v857, %v859
      %v862 = vsel %vm860, %v859, %v857
      %s863 = scalar_lea.vmem %s10, 6
      %v864 = vld [vmem:[%s863] ss:$8 sm:$0x3]
      %v866 = vlaneseq
      %v867 = vshrl.u32 %v866, 7
      %v868 = vsub.s32 0, %v867
      %v869 = vrot.slane %v864, %v868
      %v870 = vlaneseq
      %v871 = vshrl.u32 %v870, 7
      %v872 = vsub.s32 1, %v871
      %v873 = vrot.slane %v864, %v872
      %v876 = vmul.f32 %v861, %v869
      %v877 = vmul.f32 %v862, %v873
      %878 = vrot.lane.b32.xlu0 %v745, 96
      %v879 = vpop.permute.xlu0 %878
      %880 = vrot.lane.b32.xlu0 %v746, 96
      %v881 = vpop.permute.xlu0 %880
      %vm882 = vcmp.lt.s32.totalorder %v435, 96
      %v883 = vsel %vm882, %v879, %v881
      %v884 = vsel %vm882, %v881, %v879
      %s885 = scalar_lea.vmem %s10, 7
      %v886 = vld [vmem:[%s885] ss:$8 sm:$0x3]
      %v888 = vlaneseq
      %v889 = vshrl.u32 %v888, 7
      %v890 = vsub.s32 0, %v889
      %v891 = vrot.slane %v886, %v890
      %v892 = vlaneseq
      %v893 = vshrl.u32 %v892, 7
      %v894 = vsub.s32 1, %v893
      %v895 = vrot.slane %v886, %v894
      %v898 = vmul.f32 %v883, %v891
      %v899 = vmul.f32 %v884, %v895
      %900 = vrot.lane.b32.xlu0 %v745, 94
      %v901 = vpop.permute.xlu0 %900
      %902 = vrot.lane.b32.xlu0 %v746, 94
      %v903 = vpop.permute.xlu0 %902
      %vm904 = vcmp.lt.s32.totalorder %v435, 94
      %v905 = vsel %vm904, %v901, %v903
      %v906 = vsel %vm904, %v903, %v901
      %s907 = scalar_lea.vmem %s10, 16
      %v908 = vld [vmem:[%s907] ss:$8 sm:$0x3]
      %v910 = vlaneseq
      %v911 = vshrl.u32 %v910, 7
      %v912 = vsub.s32 0, %v911
      %v913 = vrot.slane %v908, %v912
      %v914 = vlaneseq
      %v915 = vshrl.u32 %v914, 7
      %v916 = vsub.s32 1, %v915
      %v917 = vrot.slane %v908, %v916
      %v920 = vmul.f32 %v905, %v913
      %v921 = vmul.f32 %v906, %v917
      %v922 = vld [vmem:[%s3] sm:$0xff]
      %v923 = vld [vmem:[%s4] sm:$0xff]
      %925 = vset.pattern.permute.xlu0 0
      %926 = vperm.xlu0 %925, %v923
      %v927 = vpop.permute.xlu0 %926
      %v930 = vsel %vm614, %v922, 0
      %932 = vmatprep.subr.mxu0 0.0
      %933 = vmatpush1.msra.mxu0 0.0
      %934 = vmatprep.subr.mxu0 0.0
      %935 = vmatpush1.msra.mxu0 0.0
      %936 = vmatprep.subr.mxu0 0.0
      %937 = vmatpush1.msra.mxu0 0.0
      %938 = vmatprep.subr.mxu0 0.0
      %939 = vmatpush1.msra.mxu0 0.0
      %940 = vmatprep.subr.mxu0 0.0
      %941 = vmatpush1.msra.mxu0 0.0
      %942 = vmatprep.subr.mxu0 0.0
      %943 = vmatpush1.msra.mxu0 0.0
      %944 = vmatprep.subr.mxu0 0.0
      %945 = vmatpush1.msra.mxu0 0.0
      %946 = vmatprep.subr.mxu0 %v921
      %947 = vmatpush1.msra.mxu0 %v920
      %948 = vmatprep.subr.mxu0 %v899
      %949 = vmatpush1.msra.mxu0 %v898
      %950 = vmatprep.subr.mxu0 %v877
      %951 = vmatpush1.msra.mxu0 %v876
      %952 = vmatprep.subr.mxu0 %v855
      %953 = vmatpush1.msra.mxu0 %v854
      %954 = vmatprep.subr.mxu0 %v746
      %955 = vmatpush1.msra.mxu0 %v745
      %956 = vmatprep.subr.mxu0 %v833
      %957 = vmatpush1.msra.mxu0 %v832
      %958 = vmatprep.subr.mxu0 %v811
      %959 = vmatpush1.msra.mxu0 %v810
      %960 = vmatprep.subr.mxu0 %v789
      %961 = vmatpush1.msra.mxu0 %v788
      %962 = vmatprep.subr.mxu0 %v767
      %963 = vmatpush1.msra.mxu0 %v766
      %964 = vmatprep.subr.mxu0 0.0
      %965 = vmatpush2.msra.mxu0 0.0
      %966 = vmatprep.subr.mxu0 0.0
      %967 = vmatpush2.msra.mxu0 0.0
      %968 = vmatprep.subr.mxu0 0.0
      %969 = vmatpush2.msra.mxu0 0.0
      %970 = vmatprep.subr.mxu0 0.0
      %971 = vmatpush2.msra.mxu0 0.0
      %972 = vmatprep.subr.mxu0 0.0
      %973 = vmatpush2.msra.mxu0 0.0
      %974 = vmatprep.subr.mxu0 0.0
      %975 = vmatpush2.msra.mxu0 0.0
      %976 = vmatprep.subr.mxu0 0.0
      %977 = vmatpush2.msra.mxu0 0.0
      %978 = vmatprep.subr.mxu0 0.0
      %979 = vmatpush2.msra.mxu0 0.0
      %980 = vmatprep.subr.mxu0 0.0
      %981 = vmatpush2.msra.mxu0 0.0
      %982 = vmatprep.subr.mxu0 0.0
      %983 = vmatpush2.msra.mxu0 0.0
      %984 = vmatprep.subr.mxu0 0.0
      %985 = vmatpush2.msra.mxu0 0.0
      %986 = vmatprep.subr.mxu0 0.0
      %987 = vmatpush2.msra.mxu0 0.0
      %988 = vmatprep.subr.mxu0 0.0
      %989 = vmatpush2.msra.mxu0 0.0
      %990 = vmatprep.subr.mxu0 0.0
      %991 = vmatpush2.msra.mxu0 0.0
      %992 = vmatprep.subr.mxu0 0.0
      %993 = vmatpush2.msra.mxu0 0.0
      %994 = vmatprep.subr.mxu0 0.0
      %995 = vmatpush2.msra.mxu0 0.0
      %996 = vmatprep.mubr.f32.mxu0 0.0
      %997 = vmatmul.mubr.f32.gmra.mxu0 %v930
      %v998 = vpop.f32.mrf.mxu0
      %v999 = vadd.f32 %v927, %v998
      %v1000 = vpop.f32.mrf.mxu0
      %v1001 = vadd.f32 %v927, %v1000
      %1002 = vdwg.mxu0
      %v1003 = vmul.f32 %v999, 0.01
      %v1004 = vmul.f32 %v1001, 0.01
      %v1005 = vmax.f32 %v999, %v1003
      %v1006 = vmax.f32 %v1001, %v1004
      %1007 = vrot.lane.b32.xlu0 %v1005, 127
      %v1008 = vpop.permute.xlu0 %1007
      %1009 = vrot.lane.b32.xlu0 %v1006, 127
      %v1010 = vpop.permute.xlu0 %1009
      %v1011 = vsel %vm523, %v1008, %v1010
      %v1012 = vsel %vm523, %v1010, %v1008
      %1013 = vrot.lane.b32.xlu0 %v1005, 1
      %v1014 = vpop.permute.xlu0 %1013
      %1015 = vrot.lane.b32.xlu0 %v1006, 1
      %v1016 = vpop.permute.xlu0 %1015
      %v1017 = vsel %vm501, %v1014, %v1016
      %v1018 = vsel %vm501, %v1016, %v1014
      %v1019 = vsel %vm714, %v1011, %v1018
      %v1020 = vsel %vm715, %v1012, %v1017
      %v1021 = vmax.f32 %v1005, %v1019
      %v1022 = vmax.f32 %v1006, %v1020
      %1023 = vrot.lane.b32.xlu0 %v1021, 112
      %v1024 = vpop.permute.xlu0 %1023
      %1025 = vrot.lane.b32.xlu0 %v1022, 112
      %v1026 = vpop.permute.xlu0 %1025
      %v1027 = vsel %vm567, %v1024, %v1026
      %v1028 = vsel %vm567, %v1026, %v1024
      %1029 = vrot.lane.b32.xlu0 %v1021, 16
      %v1030 = vpop.permute.xlu0 %1029
      %1031 = vrot.lane.b32.xlu0 %v1022, 16
      %v1032 = vpop.permute.xlu0 %1031
      %v1033 = vsel %vm457, %v1030, %v1032
      %v1034 = vsel %vm457, %v1032, %v1030
      %v1035 = vsel %vm741, %v1027, %v1034
      %v1036 = vsel %vm742, %v1028, %v1033
      %v1037 = vmax.f32 %v1021, %v1035
      %v1038 = vmax.f32 %v1022, %v1036
      %1039 = vrot.lane.b32.xlu0 %v1037, 126
      %v1040 = vpop.permute.xlu0 %1039
      %1041 = vrot.lane.b32.xlu0 %v1038, 126
      %v1042 = vpop.permute.xlu0 %1041
      %v1043 = vsel %vm838, %v1040, %v1042
      %v1044 = vsel %vm838, %v1042, %v1040
      %1045 = vrot.lane.b32.xlu0 %v1037, 2
      %v1046 = vpop.permute.xlu0 %1045
      %1047 = vrot.lane.b32.xlu0 %v1038, 2
      %v1048 = vpop.permute.xlu0 %1047
      %v1049 = vsel %vm816, %v1046, %v1048
      %v1050 = vsel %vm816, %v1048, %v1046
      %v1051 = vsel %vm424, 1, 0
      %v1052 = vlaneseq
      %v1053 = vshrl.u32 %v1052, 7
      %v1054 = vsub.s32 0, %v1053
      %v1055 = vrot.slane %v1051, %v1054
      %v1056 = vlaneseq
      %v1057 = vshrl.u32 %v1056, 7
      %v1058 = vsub.s32 1, %v1057
      %v1059 = vrot.slane %v1051, %v1058
      %vm1060 = vcmp.eq.s32.totalorder %v1055, 1
      %vm1061 = vcmp.eq.s32.totalorder %v1059, 1
      %v1062 = vsel %vm1060, %v1043, %v1050
      %v1063 = vsel %vm1061, %v1044, %v1049
      %v1064 = vmax.f32 %v1037, %v1062
      %v1065 = vmax.f32 %v1038, %v1063
      %1066 = vrot.lane.b32.xlu0 %v1064, 96
      %v1067 = vpop.permute.xlu0 %1066
      %1068 = vrot.lane.b32.xlu0 %v1065, 96
      %v1069 = vpop.permute.xlu0 %1068
      %v1070 = vsel %vm882, %v1067, %v1069
      %v1071 = vsel %vm882, %v1069, %v1067
      %1072 = vrot.lane.b32.xlu0 %v1064, 32
      %v1073 = vpop.permute.xlu0 %1072
      %1074 = vrot.lane.b32.xlu0 %v1065, 32
      %v1075 = vpop.permute.xlu0 %1074
      %v1076 = vsel %vm772, %v1073, %v1075
      %v1077 = vsel %vm772, %v1075, %v1073
      %v1078 = vsel %vm427, 1, 0
      %v1079 = vlaneseq
      %v1080 = vshrl.u32 %v1079, 7
      %v1081 = vsub.s32 0, %v1080
      %v1082 = vrot.slane %v1078, %v1081
      %v1083 = vlaneseq
      %v1084 = vshrl.u32 %v1083, 7
      %v1085 = vsub.s32 1, %v1084
      %v1086 = vrot.slane %v1078, %v1085
      %vm1087 = vcmp.eq.s32.totalorder %v1082, 1
      %vm1088 = vcmp.eq.s32.totalorder %v1086, 1
      %v1089 = vsel %vm1087, %v1070, %v1077
      %v1090 = vsel %vm1088, %v1071, %v1076
      %v1091 = vmax.f32 %v1064, %v1089
      %v1092 = vmax.f32 %v1065, %v1090
      %1093 = vrot.lane.b32.xlu0 %v1091, 34
      %v1094 = vpop.permute.xlu0 %1093
      %1095 = vrot.lane.b32.xlu0 %v1092, 34
      %v1096 = vpop.permute.xlu0 %1095
      %v1097 = vsel %vm751, %v1094, %v1096
      %v1098 = vsel %vm751, %v1096, %v1094
      %v1099 = vmul.f32 %v1098, %v759
      %v1100 = vmul.f32 %v1097, %v763
      %1101 = vrot.lane.b32.xlu0 %v1091, 32
      %v1102 = vpop.permute.xlu0 %1101
      %1103 = vrot.lane.b32.xlu0 %v1092, 32
      %v1104 = vpop.permute.xlu0 %1103
      %v1105 = vsel %vm772, %v1102, %v1104
      %v1106 = vsel %vm772, %v1104, %v1102
      %v1107 = vmul.f32 %v1106, %v781
      %v1108 = vmul.f32 %v1105, %v785
      %1109 = vrot.lane.b32.xlu0 %v1091, 30
      %v1110 = vpop.permute.xlu0 %1109
      %1111 = vrot.lane.b32.xlu0 %v1092, 30
      %v1112 = vpop.permute.xlu0 %1111
      %v1113 = vsel %vm794, %v1110, %v1112
      %v1114 = vsel %vm794, %v1112, %v1110
      %v1115 = vmul.f32 %v1114, %v803
      %v1116 = vmul.f32 %v1113, %v807
      %1117 = vrot.lane.b32.xlu0 %v1091, 2
      %v1118 = vpop.permute.xlu0 %1117
      %1119 = vrot.lane.b32.xlu0 %v1092, 2
      %v1120 = vpop.permute.xlu0 %1119
      %v1121 = vsel %vm816, %v1118, %v1120
      %v1122 = vsel %vm816, %v1120, %v1118
      %v1123 = vmul.f32 %v1122, %v825
      %v1124 = vmul.f32 %v1121, %v829
      %1125 = vrot.lane.b32.xlu0 %v1091, 126
      %v1126 = vpop.permute.xlu0 %1125
      %1127 = vrot.lane.b32.xlu0 %v1092, 126
      %v1128 = vpop.permute.xlu0 %1127
      %v1129 = vsel %vm838, %v1126, %v1128
      %v1130 = vsel %vm838, %v1128, %v1126
      %v1131 = vmul.f32 %v1129, %v847
      %v1132 = vmul.f32 %v1130, %v851
      %1133 = vrot.lane.b32.xlu0 %v1091, 98
      %v1134 = vpop.permute.xlu0 %1133
      %1135 = vrot.lane.b32.xlu0 %v1092, 98
      %v1136 = vpop.permute.xlu0 %1135
      %v1137 = vsel %vm860, %v1134, %v1136
      %v1138 = vsel %vm860, %v1136, %v1134
      %v1139 = vmul.f32 %v1137, %v869
      %v1140 = vmul.f32 %v1138, %v873
      %1141 = vrot.lane.b32.xlu0 %v1091, 96
      %v1142 = vpop.permute.xlu0 %1141
      %1143 = vrot.lane.b32.xlu0 %v1092, 96
      %v1144 = vpop.permute.xlu0 %1143
      %v1145 = vsel %vm882, %v1142, %v1144
      %v1146 = vsel %vm882, %v1144, %v1142
      %v1147 = vmul.f32 %v1145, %v891
      %v1148 = vmul.f32 %v1146, %v895
      %1149 = vrot.lane.b32.xlu0 %v1091, 94
      %v1150 = vpop.permute.xlu0 %1149
      %1151 = vrot.lane.b32.xlu0 %v1092, 94
      %v1152 = vpop.permute.xlu0 %1151
      %v1153 = vsel %vm904, %v1150, %v1152
      %v1154 = vsel %vm904, %v1152, %v1150
      %v1155 = vmul.f32 %v1153, %v913
      %v1156 = vmul.f32 %v1154, %v917
      %v1157 = vld [vmem:[%s5] sm:$0xff]
      %v1158 = vld [vmem:[%s6] sm:$0xff]
      %1160 = vset.pattern.permute.xlu0 0
      %1161 = vperm.xlu0 %1160, %v1158
      %v1162 = vpop.permute.xlu0 %1161
      %v1165 = vsel %vm614, %v1157, 0
      %1167 = vmatprep.subr.mxu0 0.0
      %1168 = vmatpush1.msra.mxu0 0.0
      %1169 = vmatprep.subr.mxu0 0.0
      %1170 = vmatpush1.msra.mxu0 0.0
      %1171 = vmatprep.subr.mxu0 0.0
      %1172 = vmatpush1.msra.mxu0 0.0
      %1173 = vmatprep.subr.mxu0 0.0
      %1174 = vmatpush1.msra.mxu0 0.0
      %1175 = vmatprep.subr.mxu0 0.0
      %1176 = vmatpush1.msra.mxu0 0.0
      %1177 = vmatprep.subr.mxu0 0.0
      %1178 = vmatpush1.msra.mxu0 0.0
      %1179 = vmatprep.subr.mxu0 0.0
      %1180 = vmatpush1.msra.mxu0 0.0
      %1181 = vmatprep.subr.mxu0 %v1156
      %1182 = vmatpush1.msra.mxu0 %v1155
      %1183 = vmatprep.subr.mxu0 %v1148
      %1184 = vmatpush1.msra.mxu0 %v1147
      %1185 = vmatprep.subr.mxu0 %v1140
      %1186 = vmatpush1.msra.mxu0 %v1139
      %1187 = vmatprep.subr.mxu0 %v1132
      %1188 = vmatpush1.msra.mxu0 %v1131
      %1189 = vmatprep.subr.mxu0 %v1092
      %1190 = vmatpush1.msra.mxu0 %v1091
      %1191 = vmatprep.subr.mxu0 %v1124
      %1192 = vmatpush1.msra.mxu0 %v1123
      %1193 = vmatprep.subr.mxu0 %v1116
      %1194 = vmatpush1.msra.mxu0 %v1115
      %1195 = vmatprep.subr.mxu0 %v1108
      %1196 = vmatpush1.msra.mxu0 %v1107
      %1197 = vmatprep.subr.mxu0 %v1100
      %1198 = vmatpush1.msra.mxu0 %v1099
      %1199 = vmatprep.subr.mxu0 0.0
      %1200 = vmatpush2.msra.mxu0 0.0
      %1201 = vmatprep.subr.mxu0 0.0
      %1202 = vmatpush2.msra.mxu0 0.0
      %1203 = vmatprep.subr.mxu0 0.0
      %1204 = vmatpush2.msra.mxu0 0.0
      %1205 = vmatprep.subr.mxu0 0.0
      %1206 = vmatpush2.msra.mxu0 0.0
      %1207 = vmatprep.subr.mxu0 0.0
      %1208 = vmatpush2.msra.mxu0 0.0
      %1209 = vmatprep.subr.mxu0 0.0
      %1210 = vmatpush2.msra.mxu0 0.0
      %1211 = vmatprep.subr.mxu0 0.0
      %1212 = vmatpush2.msra.mxu0 0.0
      %1213 = vmatprep.subr.mxu0 0.0
      %1214 = vmatpush2.msra.mxu0 0.0
      %1215 = vmatprep.subr.mxu0 0.0
      %1216 = vmatpush2.msra.mxu0 0.0
      %1217 = vmatprep.subr.mxu0 0.0
      %1218 = vmatpush2.msra.mxu0 0.0
      %1219 = vmatprep.subr.mxu0 0.0
      %1220 = vmatpush2.msra.mxu0 0.0
      %1221 = vmatprep.subr.mxu0 0.0
      %1222 = vmatpush2.msra.mxu0 0.0
      %1223 = vmatprep.subr.mxu0 0.0
      %1224 = vmatpush2.msra.mxu0 0.0
      %1225 = vmatprep.subr.mxu0 0.0
      %1226 = vmatpush2.msra.mxu0 0.0
      %1227 = vmatprep.subr.mxu0 0.0
      %1228 = vmatpush2.msra.mxu0 0.0
      %1229 = vmatprep.subr.mxu0 0.0
      %1230 = vmatpush2.msra.mxu0 0.0
      %1231 = vmatprep.mubr.f32.mxu0 0.0
      %1232 = vmatmul.mubr.f32.gmra.mxu0 %v1165
      %v1233 = vpop.f32.mrf.mxu0
      %v1234 = vadd.f32 %v1162, %v1233
      %v1235 = vpop.f32.mrf.mxu0
      %v1236 = vadd.f32 %v1162, %v1235
      %1237 = vdwg.mxu0
      %v1238 = vmul.f32 %v1234, 0.01
      %v1239 = vmul.f32 %v1236, 0.01
      %v1240 = vmax.f32 %v1234, %v1238
      %v1241 = vmax.f32 %v1236, %v1239
      %1242 = vrot.lane.b32.xlu0 %v1240, 17
      %v1243 = vpop.permute.xlu0 %1242
      %1244 = vrot.lane.b32.xlu0 %v1241, 17
      %v1245 = vpop.permute.xlu0 %1244
      %v1246 = vsel %vm436, %v1243, %v1245
      %v1247 = vsel %vm436, %v1245, %v1243
      %v1248 = vmul.f32 %v1247, %v444
      %v1249 = vmul.f32 %v1246, %v448
      %1250 = vrot.lane.b32.xlu0 %v1240, 16
      %v1251 = vpop.permute.xlu0 %1250
      %1252 = vrot.lane.b32.xlu0 %v1241, 16
      %v1253 = vpop.permute.xlu0 %1252
      %v1254 = vsel %vm457, %v1251, %v1253
      %v1255 = vsel %vm457, %v1253, %v1251
      %v1256 = vmul.f32 %v1255, %v466
      %v1257 = vmul.f32 %v1254, %v470
      %1258 = vrot.lane.b32.xlu0 %v1240, 15
      %v1259 = vpop.permute.xlu0 %1258
      %1260 = vrot.lane.b32.xlu0 %v1241, 15
      %v1261 = vpop.permute.xlu0 %1260
      %v1262 = vsel %vm479, %v1259, %v1261
      %v1263 = vsel %vm479, %v1261, %v1259
      %v1264 = vmul.f32 %v1263, %v488
      %v1265 = vmul.f32 %v1262, %v492
      %1266 = vrot.lane.b32.xlu0 %v1240, 1
      %v1267 = vpop.permute.xlu0 %1266
      %1268 = vrot.lane.b32.xlu0 %v1241, 1
      %v1269 = vpop.permute.xlu0 %1268
      %v1270 = vsel %vm501, %v1267, %v1269
      %v1271 = vsel %vm501, %v1269, %v1267
      %v1272 = vmul.f32 %v1271, %v510
      %v1273 = vmul.f32 %v1270, %v514
      %1274 = vrot.lane.b32.xlu0 %v1240, 127
      %v1275 = vpop.permute.xlu0 %1274
      %1276 = vrot.lane.b32.xlu0 %v1241, 127
      %v1277 = vpop.permute.xlu0 %1276
      %v1278 = vsel %vm523, %v1275, %v1277
      %v1279 = vsel %vm523, %v1277, %v1275
      %v1280 = vmul.f32 %v1278, %v532
      %v1281 = vmul.f32 %v1279, %v536
      %1282 = vrot.lane.b32.xlu0 %v1240, 113
      %v1283 = vpop.permute.xlu0 %1282
      %1284 = vrot.lane.b32.xlu0 %v1241, 113
      %v1285 = vpop.permute.xlu0 %1284
      %v1286 = vsel %vm545, %v1283, %v1285
      %v1287 = vsel %vm545, %v1285, %v1283
      %v1288 = vmul.f32 %v1286, %v554
      %v1289 = vmul.f32 %v1287, %v558
      %1290 = vrot.lane.b32.xlu0 %v1240, 112
      %v1291 = vpop.permute.xlu0 %1290
      %1292 = vrot.lane.b32.xlu0 %v1241, 112
      %v1293 = vpop.permute.xlu0 %1292
      %v1294 = vsel %vm567, %v1291, %v1293
      %v1295 = vsel %vm567, %v1293, %v1291
      %v1296 = vmul.f32 %v1294, %v576
      %v1297 = vmul.f32 %v1295, %v580
      %1298 = vrot.lane.b32.xlu0 %v1240, 111
      %v1299 = vpop.permute.xlu0 %1298
      %1300 = vrot.lane.b32.xlu0 %v1241, 111
      %v1301 = vpop.permute.xlu0 %1300
      %v1302 = vsel %vm589, %v1299, %v1301
      %v1303 = vsel %vm589, %v1301, %v1299
      %v1304 = vmul.f32 %v1302, %v598
      %v1305 = vmul.f32 %v1303, %v602
      %v1306 = vld [vmem:[%s7] sm:$0xff]
      %v1307 = vld [vmem:[%s8] sm:$0xff]
      %1309 = vset.pattern.permute.xlu0 0
      %1310 = vperm.xlu0 %1309, %v1307
      %v1311 = vpop.permute.xlu0 %1310
      %v1314 = vsel %vm614, %v1306, 0
      %1316 = vmatprep.subr.mxu0 0.0
      %1317 = vmatpush1.msra.mxu0 0.0
      %1318 = vmatprep.subr.mxu0 0.0
      %1319 = vmatpush1.msra.mxu0 0.0
      %1320 = vmatprep.subr.mxu0 0.0
      %1321 = vmatpush1.msra.mxu0 0.0
      %1322 = vmatprep.subr.mxu0 0.0
      %1323 = vmatpush1.msra.mxu0 0.0
      %1324 = vmatprep.subr.mxu0 0.0
      %1325 = vmatpush1.msra.mxu0 0.0
      %1326 = vmatprep.subr.mxu0 0.0
      %1327 = vmatpush1.msra.mxu0 0.0
      %1328 = vmatprep.subr.mxu0 0.0
      %1329 = vmatpush1.msra.mxu0 0.0
      %1330 = vmatprep.subr.mxu0 %v1305
      %1331 = vmatpush1.msra.mxu0 %v1304
      %1332 = vmatprep.subr.mxu0 %v1297
      %1333 = vmatpush1.msra.mxu0 %v1296
      %1334 = vmatprep.subr.mxu0 %v1289
      %1335 = vmatpush1.msra.mxu0 %v1288
      %1336 = vmatprep.subr.mxu0 %v1281
      %1337 = vmatpush1.msra.mxu0 %v1280
      %1338 = vmatprep.subr.mxu0 %v1241
      %1339 = vmatpush1.msra.mxu0 %v1240
      %1340 = vmatprep.subr.mxu0 %v1273
      %1341 = vmatpush1.msra.mxu0 %v1272
      %1342 = vmatprep.subr.mxu0 %v1265
      %1343 = vmatpush1.msra.mxu0 %v1264
      %1344 = vmatprep.subr.mxu0 %v1257
      %1345 = vmatpush1.msra.mxu0 %v1256
      %1346 = vmatprep.subr.mxu0 %v1249
      %1347 = vmatpush1.msra.mxu0 %v1248
      %1348 = vmatprep.subr.mxu0 0.0
      %1349 = vmatpush2.msra.mxu0 0.0
      %1350 = vmatprep.subr.mxu0 0.0
      %1351 = vmatpush2.msra.mxu0 0.0
      %1352 = vmatprep.subr.mxu0 0.0
      %1353 = vmatpush2.msra.mxu0 0.0
      %1354 = vmatprep.subr.mxu0 0.0
      %1355 = vmatpush2.msra.mxu0 0.0
      %1356 = vmatprep.subr.mxu0 0.0
      %1357 = vmatpush2.msra.mxu0 0.0
      %1358 = vmatprep.subr.mxu0 0.0
      %1359 = vmatpush2.msra.mxu0 0.0
      %1360 = vmatprep.subr.mxu0 0.0
      %1361 = vmatpush2.msra.mxu0 0.0
      %1362 = vmatprep.subr.mxu0 0.0
      %1363 = vmatpush2.msra.mxu0 0.0
      %1364 = vmatprep.subr.mxu0 0.0
      %1365 = vmatpush2.msra.mxu0 0.0
      %1366 = vmatprep.subr.mxu0 0.0
      %1367 = vmatpush2.msra.mxu0 0.0
      %1368 = vmatprep.subr.mxu0 0.0
      %1369 = vmatpush2.msra.mxu0 0.0
      %1370 = vmatprep.subr.mxu0 0.0
      %1371 = vmatpush2.msra.mxu0 0.0
      %1372 = vmatprep.subr.mxu0 0.0
      %1373 = vmatpush2.msra.mxu0 0.0
      %1374 = vmatprep.subr.mxu0 0.0
      %1375 = vmatpush2.msra.mxu0 0.0
      %1376 = vmatprep.subr.mxu0 0.0
      %1377 = vmatpush2.msra.mxu0 0.0
      %1378 = vmatprep.subr.mxu0 0.0
      %1379 = vmatpush2.msra.mxu0 0.0
      %1380 = vmatprep.mubr.f32.mxu0 0.0
      %1381 = vmatmul.mubr.f32.gmra.mxu0 %v1314
      %v1382 = vpop.f32.mrf.mxu0
      %v1383 = vadd.f32 %v1311, %v1382
      %v1384 = vpop.f32.mrf.mxu0
      %v1385 = vadd.f32 %v1311, %v1384
      %1386 = vdwg.mxu0
      %v1387 = vmul.f32 %v1383, 0.01
      %v1388 = vmul.f32 %v1385, 0.01
      %v1389 = vmax.f32 %v1383, %v1387
      %v1390 = vmax.f32 %v1385, %v1388
      %v1391 = vsub.f32 0.0, %v1389
      %v1392 = vsub.f32 0.0, %v1390
      %v1393 = vmul.f32 %v1391, 1.442695
      %v1394 = vpow.pop %v1393
      %v1395 = vmul.f32 %v1392, 1.442695
      %v1396 = vpow.pop %v1395
      %v1397 = vadd.f32 %v1394, 1.0
      %v1398 = vadd.f32 %v1396, 1.0
      %v1399 = vrcp.pop %v1397
      %v1400 = vrcp.pop %v1398
      %v1403 = vcombine.low %v1389, %v1390
      %v1405 = vunpack.c.l.s4 1966171168
      %v1406 = vunpack.c.0.s8 %v1405
      %v1407 = vlaneseq
      %v1408 = vshrl.u32 %v1407, 7
      %v1409 = vsub.s32 %v1406, %v1408
      %v1410 = vrot.slane %v1403, %v1409
      %v1412 = vunpack.c.l.s4 1966171168
      %v1413 = vunpack.c.0.s8 %v1412
      %v1414 = vlaneseq
      %v1415 = vshrl.u32 %v1414, 7
      %v1416 = vsub.s32 %v1413, %v1415
      %v1417 = vrot.slane %v1410, %v1416
      %v1419 = vlaneseq
      %vm1420 = vcmp.ge.s32.totalorder %v1419, 0
      %vm1421 = vcmp.lt.s32.totalorder %v1419, 256
      %vm1422 = vmand %vm1420, %vm1421
      %1423 = vst.msk [vmem:[%s415] ss:$2 sm:$0x3] %vm1422, %v1417
      %v1426 = vcombine.low %v1399, %v1400
      %v1428 = vunpack.c.l.s4 1966171168
      %v1429 = vunpack.c.0.s8 %v1428
      %v1430 = vlaneseq
      %v1431 = vshrl.u32 %v1430, 7
      %v1432 = vsub.s32 %v1429, %v1431
      %v1433 = vrot.slane %v1426, %v1432
      %v1435 = vunpack.c.l.s4 1966171168
      %v1436 = vunpack.c.0.s8 %v1435
      %v1437 = vlaneseq
      %v1438 = vshrl.u32 %v1437, 7
      %v1439 = vsub.s32 %v1436, %v1438
      %v1440 = vrot.slane %v1433, %v1439
      %s1442 = scalar_lea.vmem %s415, 1
      %1443 = vst.msk [vmem:[%s1442] ss:$2 sm:$0x3] %vm1422, %v1440
      %s1444 = smul.u32 2, %s23
      %p1445 = scmp.lt.s32.totalorder %s1444, 3
      %s1446 = scalar_select %p1445, %s1444, 3
      %s1447 = smul.addr %s1446, 2
      %s1448 = scalar_lea.vmem %s12, %s1447
      // Predicated region
      $region69: #{conv_autoencoder_forward.1} parent=67 // pred_check
        %p1449 = pneg %p298
      $region70: #{conv_autoencoder_forward.1} parent=67 // pred_check_branch
        %1451 = sbr.rel (%p1449) target = $region72
      $region71: #{conv_autoencoder_forward.1} parent=67 // pred_region
        %s1452 = smul.u32 2, %s23
      $region72: #{conv_autoencoder_forward.1} parent=67 // pred_fallthru
        _
    $region68: #{conv_autoencoder_forward.1} parent=5 // pred_fallthru
      _
    %p1453 = scmp.le.s32.totalorder 2, %s18
    // Predicated region
    $region73: #{conv_autoencoder_forward.1} parent=5 // pred_check
      %p1454 = pneg %p1453
    $region74: #{conv_autoencoder_forward.1} parent=5 // pred_check_branch
      %1456 = sbr.rel (%p1454) target = $region76
    $region75: #{conv_autoencoder_forward.1} parent=5 // pred_region
      %s1457 = ssub.s32 %s18, 2
      // Predicated region
      $region77: #{conv_autoencoder_forward.1} parent=75 // pred_check
        %p1458 = pneg %p304
      $region78: #{conv_autoencoder_forward.1} parent=75 // pred_check_branch
        %1460 = sbr.rel (%p1458) target = $region80
      $region79: #{conv_autoencoder_forward.1} parent=75 // pred_region
        %s1461 = smul.u32 2, %s24
        %p1462 = scmp.lt.s32.totalorder %s1461, 3
        %s1463 = scalar_select %p1462, %s1461, 3
        %s1464 = smul.addr %s1463, 2
        %s1465 = scalar_lea.vmem %s12, %s1464
      $region80: #{conv_autoencoder_forward.1} parent=75 // pred_fallthru
        _
    $region76: #{conv_autoencoder_forward.1} parent=5 // pred_fallthru
      _
  $region6: #{conv_autoencoder_forward.1} parent=0 // loop_footer
    %s22 = sadd.s32 1, %s18
  $region7: #{conv_autoencoder_forward.1} parent=0 // loop_footer_branch
    %17 = sbr.rel target = $region3
  $region8: #{conv_autoencoder_forward.1} parent=0 // loop_exit
    _

</llo_original>
